<compile_context>
chip_gen: v5e
topology: v5e:2x2
jax: 0.10.0
libtpu: 0.0.40
codegen_flags: <defaults>
</compile_context>

<pallas_src>
import numpy as np
import jax
import jax.numpy as jnp
from jax.experimental import pallas as pl
from jax.experimental.pallas import tpu as pltpu

# ---------------- model hyper-params (small, deterministic) ----------------
N_HEAD = 4
D_MODEL = 32
D_K = 8
D_V = 8
SZ_B = 2
LEN_Q = 8          # len_q == len_k == len_v
LN_EPS = 1e-5


def mha_kernel(q_ref, k_ref, v_ref, mask_ref,
               wq_ref, bq_ref, wk_ref, bk_ref, wv_ref, bv_ref,
               wfc_ref, bfc_ref, gamma_ref, beta_ref,
               out_ref, attn_ref=None):
    """One batch element per grid step; all heads batched in one shot."""
    _, Lq, Dm = q_ref.shape
    Lk = k_ref.shape[1]
    H = wq_ref.shape[0]

    q2 = q_ref[0]                      # (Lq, Dm)
    k2 = k_ref[0]                      # (Lk, Dm)
    v2 = v_ref[0]                      # (Lk, Dm)

    # Head-batched projections.  Weights come in pre-split as (H, Dm, Dk/Dv),
    # with the 1/sqrt(d_k) softmax scale already folded into wq/bq on the host.
    # Outputs are head-leading (H, L, D): canonical batched dot_general, no
    # in-kernel split-reshapes or transposes needed anywhere downstream.
    qb = jnp.broadcast_to(q2, (H, Lq, Dm))
    kb = jnp.broadcast_to(k2, (H, Lk, Dm))
    vb = jnp.broadcast_to(v2, (H, Lk, Dm))
    Qh = jnp.einsum('hqm,hmd->hqd', qb, wq_ref[...],
                    preferred_element_type=jnp.float32) + bq_ref[...]
    Kh = jnp.einsum('hkm,hmd->hkd', kb, wk_ref[...],
                    preferred_element_type=jnp.float32) + bk_ref[...]
    Vh = jnp.einsum('hkm,hmd->hkd', vb, wv_ref[...],
                    preferred_element_type=jnp.float32) + bv_ref[...]

    # Additive mask bias computed once, broadcast over heads.
    # -1e30 underflows to exactly 0 after softmax for any row that has at least
    # one unmasked key (a fully-masked row becomes uniform instead of NaN).
    bias = jnp.where(mask_ref[0] != 0, jnp.float32(-1e30), jnp.float32(0.0))

    s = jnp.einsum('hqd,hkd->hqk', Qh, Kh,
                   preferred_element_type=jnp.float32) + bias[None, :, :]

    # Numerically-stable softmax with EXACT normalization (f32 throughout;
    # v5e has no bf16 VPU/EUP path so f32 elementwise is the right choice).
    m = jnp.max(s, axis=-1, keepdims=True)
    e = jnp.exp(s - m)
    p = e / jnp.sum(e, axis=-1, keepdims=True)          # (H, Lq, Lk)

    if attn_ref is not None:
        attn_ref[...] = p                               # single whole-block store

    # Context + output FC: per-head batched matmuls, summed over heads (VPU).
    ctx = jnp.einsum('hqk,hkv->hqv', p, Vh,
                     preferred_element_type=jnp.float32)        # (H, Lq, Dv)
    fc = jnp.einsum('hqv,hvm->hqm', ctx, wfc_ref[...],
                    preferred_element_type=jnp.float32)         # (H, Lq, Dm)
    x = jnp.sum(fc, axis=0) + bfc_ref[...] + q2         # FC bias + residual

    # LayerNorm, one flat (Lq, Dm) store.
    mean = jnp.mean(x, axis=-1, keepdims=True)
    var = jnp.mean((x - mean) ** 2, axis=-1, keepdims=True)
    y = (x - mean) * jax.lax.rsqrt(var + LN_EPS)
    out_ref[...] = y * gamma_ref[...] + beta_ref[...]


def _prep_params(p):
    """One-time host-side weight preprocessing (layout plumbing, no per-call cost)."""
    scale = np.float32(1.0 / np.sqrt(D_K))
    # nn.Linear weight is (out, in); we want per-head (H, Dm, Dk/Dv) for x @ W.
    wq = (p["w_q"] * scale).reshape(N_HEAD, D_K, D_MODEL).transpose(0, 2, 1)
    bq = (p["b_q"] * scale).reshape(N_HEAD, 1, D_K)
    wk = p["w_k"].reshape(N_HEAD, D_K, D_MODEL).transpose(0, 2, 1)
    bk = p["b_k"].reshape(N_HEAD, 1, D_K)
    wv = p["w_v"].reshape(N_HEAD, D_V, D_MODEL).transpose(0, 2, 1)
    bv = p["b_v"].reshape(N_HEAD, 1, D_V)
    # fc weight (Dm, H*Dv) -> (H, Dv, Dm) so ctx (H,Lq,Dv) @ wfc -> (H,Lq,Dm).
    wfc = p["w_fc"].T.reshape(N_HEAD, D_V, D_MODEL)
    return dict(wq=wq, bq=bq, wk=wk, bk=bk, wv=wv, bv=bv, wfc=wfc)


def multi_head_attention(q, k, v, mask, params, return_attn=True):
    sz_b, len_q, d_model = q.shape
    len_k = k.shape[1]
    pp = _prep_params(params)

    args = (q, k, v, mask,
            pp["wq"], pp["bq"], pp["wk"], pp["bk"], pp["wv"], pp["bv"],
            pp["wfc"], params["b_fc"], params["gamma"], params["beta"])

    def batch_spec(a):                       # per-batch activation block
        return pl.BlockSpec((1,) + a.shape[1:], lambda b: (b,) + (0,) * (a.ndim - 1))

    def full_spec(a):                        # whole-array weight block (constant index)
        nd = a.ndim
        return pl.BlockSpec(a.shape, lambda b, _nd=nd: (0,) * _nd)

    in_specs = [batch_spec(q), batch_spec(k), batch_spec(v), batch_spec(mask)]
    in_specs += [full_spec(a) for a in args[4:]]

    o_shape = jax.ShapeDtypeStruct((sz_b * len_q, d_model), jnp.float32)
    o_spec = pl.BlockSpec((len_q, d_model), lambda b: (b, 0))
    if return_attn:
        a_shape = jax.ShapeDtypeStruct((N_HEAD, sz_b * len_q, len_k), jnp.float32)
        a_spec = pl.BlockSpec((N_HEAD, len_q, len_k), lambda b: (0, b, 0))
        out_shape, out_specs = (o_shape, a_shape), (o_spec, a_spec)
    else:
        out_shape, out_specs = o_shape, o_spec

    outs = pl.pallas_call(
        mha_kernel,
        out_shape=out_shape,
        grid=(sz_b,),                        # >=2 parallel blocks -> both v7x cores
        in_specs=in_specs,
        out_specs=out_specs,
        compiler_params=pltpu.CompilerParams(
            dimension_semantics=("parallel",)),
    )(*args)

    if return_attn:
        out2d, attn3 = outs
        # (H, B*Lq, Lk) -> (H*B, Lq, Lk): plain flat reshape matches the
        # PyTorch head-major / batch-minor view ordering exactly.
        attn = attn3.reshape(N_HEAD * sz_b, len_q, len_k)
    else:
        out2d, attn = outs, None

    out = out2d.reshape(sz_b, len_q, d_model)
    return out, attn


def reference(q, k, v, mask, p):
    """Pure-JAX reference mirroring the PyTorch forward (eval mode)."""
    sz_b, len_q, _ = q.shape
    Q = q @ p["w_q"].T + p["b_q"]
    K = k @ p["w_k"].T + p["b_k"]
    V = v @ p["w_v"].T + p["b_v"]
    Q = Q.reshape(sz_b, len_q, N_HEAD, D_K).transpose(2, 0, 1, 3).reshape(-1, len_q, D_K)
    K = K.reshape(sz_b, len_q, N_HEAD, D_K).transpose(2, 0, 1, 3).reshape(-1, len_q, D_K)
    V = V.reshape(sz_b, len_q, N_HEAD, D_V).transpose(2, 0, 1, 3).reshape(-1, len_q, D_V)
    mask_r = jnp.tile(mask, (N_HEAD, 1, 1))
    scores = jnp.einsum("bqd,bkd->bqk", Q, K) / np.power(D_K, 0.5)
    scores = jnp.where(mask_r != 0, -jnp.inf, scores)
    attn = jax.nn.softmax(scores, axis=-1)
    out = jnp.einsum("bqk,bkd->bqd", attn, V)
    out = out.reshape(N_HEAD, sz_b, len_q, D_V).transpose(1, 2, 0, 3).reshape(sz_b, len_q, -1)
    out = out @ p["w_fc"].T + p["b_fc"]
    x = out + q
    mean = x.mean(-1, keepdims=True)
    var = ((x - mean) ** 2).mean(-1, keepdims=True)
    y = (x - mean) / jnp.sqrt(var + LN_EPS)
    return y * p["gamma"] + p["beta"], attn


if __name__ == "__main__":
    key = jax.random.PRNGKey(0)
    ks = jax.random.split(key, 12)

    # Deterministic parameter init (nn.Linear / nn.LayerNorm shapes).
    params = {
        "w_q": jax.random.normal(ks[0], (N_HEAD * D_K, D_MODEL), jnp.float32)
               * np.sqrt(2.0 / (D_MODEL + D_K)),
        "b_q": jnp.zeros((1, N_HEAD * D_K), jnp.float32),
        "w_k": jax.random.normal(ks[1], (N_HEAD * D_K, D_MODEL), jnp.float32)
               * np.sqrt(2.0 / (D_MODEL + D_K)),
        "b_k": jnp.zeros((1, N_HEAD * D_K), jnp.float32),
        "w_v": jax.random.normal(ks[2], (N_HEAD * D_V, D_MODEL), jnp.float32)
               * np.sqrt(2.0 / (D_MODEL + D_V)),
        "b_v": jnp.zeros((1, N_HEAD * D_V), jnp.float32),
        "w_fc": jax.random.normal(ks[3], (D_MODEL, N_HEAD * D_V), jnp.float32)
                * np.sqrt(1.0 / (N_HEAD * D_V)),
        "b_fc": jnp.zeros((1, D_MODEL), jnp.float32),
        "gamma": jnp.ones((1, D_MODEL), jnp.float32),
        "beta": jnp.zeros((1, D_MODEL), jnp.float32),
    }

    q = jax.random.normal(ks[4], (SZ_B, LEN_Q, D_MODEL), jnp.float32)
    k = jax.random.normal(ks[5], (SZ_B, LEN_Q, D_MODEL), jnp.float32)
    v = jax.random.normal(ks[6], (SZ_B, LEN_Q, D_MODEL), jnp.float32)

    # Padding mask: batch 0 attends to first 6 keys, batch 1 to first 8.
    valid = jnp.array([6, 8], dtype=jnp.int32)
    key_ids = jnp.arange(LEN_Q)[None, None, :]               # (1,1,Lk)
    mask = (key_ids >= valid[:, None, None]).astype(jnp.float32)
    mask = jnp.broadcast_to(mask, (SZ_B, LEN_Q, LEN_Q))

    out, attn = multi_head_attention(q, k, v, mask, params)
    jax.block_until_ready((out, attn))

    ref_out, ref_attn = reference(q, k, v, mask, params)
    np.testing.assert_allclose(np.asarray(out), np.asarray(ref_out),
                               rtol=5e-4, atol=5e-4)
    np.testing.assert_allclose(np.asarray(attn), np.asarray(ref_attn),
                               rtol=5e-4, atol=5e-4)

    print("KERNEL_OK")
</pallas_src>

<mosaic_0001>
module attributes {stable_mosaic.version = 11 : i64} {
  func.func @mha_kernel(%arg0: i32, %arg1: memref<1x8x32xf32, #tpu.memory_space<vmem>>, %arg2: memref<1x8x32xf32, #tpu.memory_space<vmem>>, %arg3: memref<1x8x32xf32, #tpu.memory_space<vmem>>, %arg4: memref<1x8x8xf32, #tpu.memory_space<vmem>>, %arg5: memref<4x32x8xf32, #tpu.memory_space<vmem>>, %arg6: memref<4x1x8xf32, #tpu.memory_space<vmem>>, %arg7: memref<4x32x8xf32, #tpu.memory_space<vmem>>, %arg8: memref<4x1x8xf32, #tpu.memory_space<vmem>>, %arg9: memref<4x32x8xf32, #tpu.memory_space<vmem>>, %arg10: memref<4x1x8xf32, #tpu.memory_space<vmem>>, %arg11: memref<4x8x32xf32, #tpu.memory_space<vmem>>, %arg12: memref<1x32xf32, #tpu.memory_space<vmem>>, %arg13: memref<1x32xf32, #tpu.memory_space<vmem>>, %arg14: memref<1x32xf32, #tpu.memory_space<vmem>>, %arg15: memref<8x32xf32, #tpu.memory_space<vmem>>, %arg16: memref<4x8x8xf32, #tpu.memory_space<vmem>>) attributes {dimension_semantics = [#tpu.dimension_semantics<parallel>], iteration_bounds = array<i64: 2>, scalar_prefetch = 0 : i64, scratch_operands = 0 : i64, tpu.core_type = #tpu.core_type<tc>, window_params = [{transform_indices = @transform_0, window_bounds = array<i64: 1, 8, 32>}, {transform_indices = @transform_1, window_bounds = array<i64: 1, 8, 32>}, {transform_indices = @transform_2, window_bounds = array<i64: 1, 8, 32>}, {transform_indices = @transform_3, window_bounds = array<i64: 1, 8, 8>}, {pipeline_mode = #tpu.pipeline_mode<synchronous>, transform_indices = @transform_4, window_bounds = array<i64: 4, 32, 8>}, {pipeline_mode = #tpu.pipeline_mode<synchronous>, transform_indices = @transform_5, window_bounds = array<i64: 4, 1, 8>}, {pipeline_mode = #tpu.pipeline_mode<synchronous>, transform_indices = @transform_6, window_bounds = array<i64: 4, 32, 8>}, {pipeline_mode = #tpu.pipeline_mode<synchronous>, transform_indices = @transform_7, window_bounds = array<i64: 4, 1, 8>}, {pipeline_mode = #tpu.pipeline_mode<synchronous>, transform_indices = @transform_8, window_bounds = array<i64: 4, 32, 8>}, {pipeline_mode = #tpu.pipeline_mode<synchronous>, transform_indices = @transform_9, window_bounds = array<i64: 4, 1, 8>}, {pipeline_mode = #tpu.pipeline_mode<synchronous>, transform_indices = @transform_10, window_bounds = array<i64: 4, 8, 32>}, {pipeline_mode = #tpu.pipeline_mode<synchronous>, transform_indices = @transform_11, window_bounds = array<i64: 1, 32>}, {pipeline_mode = #tpu.pipeline_mode<synchronous>, transform_indices = @transform_12, window_bounds = array<i64: 1, 32>}, {pipeline_mode = #tpu.pipeline_mode<synchronous>, transform_indices = @transform_13, window_bounds = array<i64: 1, 32>}, {transform_indices = @transform_14, window_bounds = array<i64: 8, 32>}, {transform_indices = @transform_15, window_bounds = array<i64: 4, 8, 8>}]} {
    %c0 = arith.constant 0 : index
    %c0_0 = arith.constant 0 : index
    %c0_1 = arith.constant 0 : index
    %0 = vector.load %arg1[%c0, %c0_0, %c0_1] : memref<1x8x32xf32, #tpu.memory_space<vmem>>, vector<1x8x32xf32>
    %1 = vector.shape_cast %0 : vector<1x8x32xf32> to vector<8x32xf32>
    %c0_2 = arith.constant 0 : index
    %c0_3 = arith.constant 0 : index
    %c0_4 = arith.constant 0 : index
    %2 = vector.load %arg2[%c0_2, %c0_3, %c0_4] : memref<1x8x32xf32, #tpu.memory_space<vmem>>, vector<1x8x32xf32>
    %3 = vector.shape_cast %2 : vector<1x8x32xf32> to vector<8x32xf32>
    %c0_5 = arith.constant 0 : index
    %c0_6 = arith.constant 0 : index
    %c0_7 = arith.constant 0 : index
    %4 = vector.load %arg3[%c0_5, %c0_6, %c0_7] : memref<1x8x32xf32, #tpu.memory_space<vmem>>, vector<1x8x32xf32>
    %5 = vector.shape_cast %4 : vector<1x8x32xf32> to vector<8x32xf32>
    %6 = vector.shape_cast %1 : vector<8x32xf32> to vector<1x8x32xf32>
    %7 = vector.broadcast %6 : vector<1x8x32xf32> to vector<4x8x32xf32>
    %8 = vector.shape_cast %3 : vector<8x32xf32> to vector<1x8x32xf32>
    %9 = vector.broadcast %8 : vector<1x8x32xf32> to vector<4x8x32xf32>
    %10 = vector.shape_cast %5 : vector<8x32xf32> to vector<1x8x32xf32>
    %11 = vector.broadcast %10 : vector<1x8x32xf32> to vector<4x8x32xf32>
    %c0_8 = arith.constant 0 : index
    %c0_9 = arith.constant 0 : index
    %c0_10 = arith.constant 0 : index
    %12 = vector.load %arg5[%c0_8, %c0_9, %c0_10] : memref<4x32x8xf32, #tpu.memory_space<vmem>>, vector<4x32x8xf32>
    "tpu.trace_start"() <{level = 10 : i32, message = "hqm,hmd->hqd"}> : () -> ()
    %cst = arith.constant dense<0.000000e+00> : vector<4x8x8xf32>
    %13 = tpu.matmul %7, %12, %cst {dimension_numbers = #tpu.dot_dimension_numbers<[2], [1], [1], [2], [0, 0, 0, 1, 1, 2], [0], [0]>} : vector<4x8x32xf32>, vector<4x32x8xf32>, vector<4x8x8xf32> -> vector<4x8x8xf32>
    "tpu.trace_stop"() : () -> ()
    %c0_11 = arith.constant 0 : index
    %c0_12 = arith.constant 0 : index
    %c0_13 = arith.constant 0 : index
    %14 = vector.load %arg6[%c0_11, %c0_12, %c0_13] : memref<4x1x8xf32, #tpu.memory_space<vmem>>, vector<4x1x8xf32>
    %15 = vector.broadcast %14 : vector<4x1x8xf32> to vector<4x8x8xf32>
    %16 = arith.addf %13, %15 : vector<4x8x8xf32>
    %c0_14 = arith.constant 0 : index
    %c0_15 = arith.constant 0 : index
    %c0_16 = arith.constant 0 : index
    %17 = vector.load %arg7[%c0_14, %c0_15, %c0_16] : memref<4x32x8xf32, #tpu.memory_space<vmem>>, vector<4x32x8xf32>
    "tpu.trace_start"() <{level = 10 : i32, message = "hkm,hmd->hkd"}> : () -> ()
    %cst_17 = arith.constant dense<0.000000e+00> : vector<4x8x8xf32>
    %18 = tpu.matmul %9, %17, %cst_17 {dimension_numbers = #tpu.dot_dimension_numbers<[2], [1], [1], [2], [0, 0, 0, 1, 1, 2], [0], [0]>} : vector<4x8x32xf32>, vector<4x32x8xf32>, vector<4x8x8xf32> -> vector<4x8x8xf32>
    "tpu.trace_stop"() : () -> ()
    %c0_18 = arith.constant 0 : index
    %c0_19 = arith.constant 0 : index
    %c0_20 = arith.constant 0 : index
    %19 = vector.load %arg8[%c0_18, %c0_19, %c0_20] : memref<4x1x8xf32, #tpu.memory_space<vmem>>, vector<4x1x8xf32>
    %20 = vector.broadcast %19 : vector<4x1x8xf32> to vector<4x8x8xf32>
    %21 = arith.addf %18, %20 : vector<4x8x8xf32>
    %c0_21 = arith.constant 0 : index
    %c0_22 = arith.constant 0 : index
    %c0_23 = arith.constant 0 : index
    %22 = vector.load %arg9[%c0_21, %c0_22, %c0_23] : memref<4x32x8xf32, #tpu.memory_space<vmem>>, vector<4x32x8xf32>
    "tpu.trace_start"() <{level = 10 : i32, message = "hkm,hmd->hkd"}> : () -> ()
    %cst_24 = arith.constant dense<0.000000e+00> : vector<4x8x8xf32>
    %23 = tpu.matmul %11, %22, %cst_24 {dimension_numbers = #tpu.dot_dimension_numbers<[2], [1], [1], [2], [0, 0, 0, 1, 1, 2], [0], [0]>} : vector<4x8x32xf32>, vector<4x32x8xf32>, vector<4x8x8xf32> -> vector<4x8x8xf32>
    "tpu.trace_stop"() : () -> ()
    %c0_25 = arith.constant 0 : index
    %c0_26 = arith.constant 0 : index
    %c0_27 = arith.constant 0 : index
    %24 = vector.load %arg10[%c0_25, %c0_26, %c0_27] : memref<4x1x8xf32, #tpu.memory_space<vmem>>, vector<4x1x8xf32>
    %25 = vector.broadcast %24 : vector<4x1x8xf32> to vector<4x8x8xf32>
    %26 = arith.addf %23, %25 : vector<4x8x8xf32>
    %c0_28 = arith.constant 0 : index
    %c0_29 = arith.constant 0 : index
    %c0_30 = arith.constant 0 : index
    %27 = vector.load %arg4[%c0_28, %c0_29, %c0_30] : memref<1x8x8xf32, #tpu.memory_space<vmem>>, vector<1x8x8xf32>
    %28 = vector.shape_cast %27 : vector<1x8x8xf32> to vector<8x8xf32>
    %cst_31 = arith.constant 0.000000e+00 : f32
    %29 = vector.broadcast %cst_31 : f32 to vector<8x8xf32>
    %30 = arith.cmpf one, %28, %29 : vector<8x8xf32>
    %cst_32 = arith.constant -1.000000e+30 : f32
    %cst_33 = arith.constant 0.000000e+00 : f32
    %31 = vector.broadcast %cst_32 : f32 to vector<8x8xf32>
    %32 = vector.broadcast %cst_33 : f32 to vector<8x8xf32>
    %33 = arith.select %30, %31, %32 : vector<8x8xi1>, vector<8x8xf32>
    "tpu.trace_start"() <{level = 10 : i32, message = "hqd,hkd->hqk"}> : () -> ()
    %cst_34 = arith.constant dense<0.000000e+00> : vector<4x8x8xf32>
    %34 = tpu.matmul %16, %21, %cst_34 {dimension_numbers = #tpu.dot_dimension_numbers<[2], [2], [1], [1], [0, 0, 0, 1, 1, 1], [0], [0]>} : vector<4x8x8xf32>, vector<4x8x8xf32>, vector<4x8x8xf32> -> vector<4x8x8xf32>
    "tpu.trace_stop"() : () -> ()
    %35 = vector.shape_cast %33 : vector<8x8xf32> to vector<1x8x8xf32>
    %36 = vector.broadcast %35 : vector<1x8x8xf32> to vector<4x8x8xf32>
    %37 = arith.addf %34, %36 : vector<4x8x8xf32>
    %cst_35 = arith.constant dense<0xFF800000> : vector<4x8xf32>
    %38 = vector.multi_reduction <maximumf>, %37, %cst_35 [2] : vector<4x8x8xf32> to vector<4x8xf32>
    %39 = vector.shape_cast %38 : vector<4x8xf32> to vector<4x8x1xf32>
    %40 = vector.broadcast %39 : vector<4x8x1xf32> to vector<4x8x8xf32>
    %41 = arith.subf %37, %40 : vector<4x8x8xf32>
    %42 = math.exp %41 : vector<4x8x8xf32>
    %cst_36 = arith.constant dense<0.000000e+00> : vector<4x8xf32>
    %43 = vector.multi_reduction <add>, %42, %cst_36 [2] : vector<4x8x8xf32> to vector<4x8xf32>
    %44 = vector.shape_cast %43 : vector<4x8xf32> to vector<4x8x1xf32>
    %45 = vector.broadcast %44 : vector<4x8x1xf32> to vector<4x8x8xf32>
    %46 = arith.divf %42, %45 : vector<4x8x8xf32>
    %c0_37 = arith.constant 0 : index
    %c0_38 = arith.constant 0 : index
    %c0_39 = arith.constant 0 : index
    %47 = vector.load %arg16[%c0_37, %c0_38, %c0_39] : memref<4x8x8xf32, #tpu.memory_space<vmem>>, vector<4x8x8xf32>
    tpu.vector_store %arg16[%c0_37, %c0_38, %c0_39], %46 {strides = array<i32>} : memref<4x8x8xf32, #tpu.memory_space<vmem>>, vector<4x8x8xf32>,
    "tpu.trace_start"() <{level = 10 : i32, message = "hqk,hkv->hqv"}> : () -> ()
    %cst_40 = arith.constant dense<0.000000e+00> : vector<4x8x8xf32>
    %48 = tpu.matmul %46, %26, %cst_40 {dimension_numbers = #tpu.dot_dimension_numbers<[2], [1], [1], [2], [0, 0, 0, 1, 1, 2], [0], [0]>} : vector<4x8x8xf32>, vector<4x8x8xf32>, vector<4x8x8xf32> -> vector<4x8x8xf32>
    "tpu.trace_stop"() : () -> ()
    %c0_41 = arith.constant 0 : index
    %c0_42 = arith.constant 0 : index
    %c0_43 = arith.constant 0 : index
    %49 = vector.load %arg11[%c0_41, %c0_42, %c0_43] : memref<4x8x32xf32, #tpu.memory_space<vmem>>, vector<4x8x32xf32>
    "tpu.trace_start"() <{level = 10 : i32, message = "hqv,hvm->hqm"}> : () -> ()
    %cst_44 = arith.constant dense<0.000000e+00> : vector<4x8x32xf32>
    %50 = tpu.matmul %48, %49, %cst_44 {dimension_numbers = #tpu.dot_dimension_numbers<[2], [1], [1], [2], [0, 0, 0, 1, 1, 2], [0], [0]>} : vector<4x8x8xf32>, vector<4x8x32xf32>, vector<4x8x32xf32> -> vector<4x8x32xf32>
    "tpu.trace_stop"() : () -> ()
    %cst_45 = arith.constant dense<0.000000e+00> : vector<8x32xf32>
    %51 = vector.multi_reduction <add>, %50, %cst_45 [0] : vector<4x8x32xf32> to vector<8x32xf32>
    %c0_46 = arith.constant 0 : index
    %c0_47 = arith.constant 0 : index
    %52 = vector.load %arg12[%c0_46, %c0_47] : memref<1x32xf32, #tpu.memory_space<vmem>>, vector<1x32xf32>
    %53 = vector.broadcast %52 : vector<1x32xf32> to vector<8x32xf32>
    %54 = arith.addf %51, %53 : vector<8x32xf32>
    %55 = arith.addf %54, %1 : vector<8x32xf32>
    %cst_48 = arith.constant dense<0.000000e+00> : vector<8xf32>
    %56 = vector.multi_reduction <add>, %55, %cst_48 [1] : vector<8x32xf32> to vector<8xf32>
    %57 = vector.shape_cast %56 : vector<8xf32> to vector<8x1xf32>
    %cst_49 = arith.constant 3.200000e+01 : f32
    %58 = vector.broadcast %cst_49 : f32 to vector<8x1xf32>
    %59 = arith.divf %57, %58 : vector<8x1xf32>
    %60 = vector.broadcast %59 : vector<8x1xf32> to vector<8x32xf32>
    %61 = arith.subf %55, %60 : vector<8x32xf32>
    %62 = arith.mulf %61, %61 : vector<8x32xf32>
    %cst_50 = arith.constant dense<0.000000e+00> : vector<8xf32>
    %63 = vector.multi_reduction <add>, %62, %cst_50 [1] : vector<8x32xf32> to vector<8xf32>
    %64 = vector.shape_cast %63 : vector<8xf32> to vector<8x1xf32>
    %cst_51 = arith.constant 3.200000e+01 : f32
    %65 = vector.broadcast %cst_51 : f32 to vector<8x1xf32>
    %66 = arith.divf %64, %65 : vector<8x1xf32>
    %67 = vector.broadcast %59 : vector<8x1xf32> to vector<8x32xf32>
    %68 = arith.subf %55, %67 : vector<8x32xf32>
    %cst_52 = arith.constant 9.99999974E-6 : f32
    %69 = vector.broadcast %cst_52 : f32 to vector<8x1xf32>
    %70 = arith.addf %66, %69 : vector<8x1xf32>
    %71 = math.rsqrt %70 : vector<8x1xf32>
    %72 = vector.broadcast %71 : vector<8x1xf32> to vector<8x32xf32>
    %73 = arith.mulf %68, %72 : vector<8x32xf32>
    %c0_53 = arith.constant 0 : index
    %c0_54 = arith.constant 0 : index
    %74 = vector.load %arg13[%c0_53, %c0_54] : memref<1x32xf32, #tpu.memory_space<vmem>>, vector<1x32xf32>
    %75 = vector.broadcast %74 : vector<1x32xf32> to vector<8x32xf32>
    %76 = arith.mulf %73, %75 : vector<8x32xf32>
    %c0_55 = arith.constant 0 : index
    %c0_56 = arith.constant 0 : index
    %77 = vector.load %arg14[%c0_55, %c0_56] : memref<1x32xf32, #tpu.memory_space<vmem>>, vector<1x32xf32>
    %78 = vector.broadcast %77 : vector<1x32xf32> to vector<8x32xf32>
    %79 = arith.addf %76, %78 : vector<8x32xf32>
    %c0_57 = arith.constant 0 : index
    %c0_58 = arith.constant 0 : index
    %80 = vector.load %arg15[%c0_57, %c0_58] : memref<8x32xf32, #tpu.memory_space<vmem>>, vector<8x32xf32>
    tpu.vector_store %arg15[%c0_57, %c0_58], %79 {strides = array<i32>} : memref<8x32xf32, #tpu.memory_space<vmem>>, vector<8x32xf32>,
    return
  }
  func.func @transform_0(%arg0: i32) -> (i32, i32, i32) {
    %c0_i32 = arith.constant 0 : i32
    %c0_i32_0 = arith.constant 0 : i32
    %c0_i32_1 = arith.constant 0 : i32
    return %arg0, %c0_i32, %c0_i32_0 : i32, i32, i32
  }
  func.func @transform_1(%arg0: i32) -> (i32, i32, i32) {
    %c0_i32 = arith.constant 0 : i32
    %c0_i32_0 = arith.constant 0 : i32
    %c0_i32_1 = arith.constant 0 : i32
    return %arg0, %c0_i32, %c0_i32_0 : i32, i32, i32
  }
  func.func @transform_2(%arg0: i32) -> (i32, i32, i32) {
    %c0_i32 = arith.constant 0 : i32
    %c0_i32_0 = arith.constant 0 : i32
    %c0_i32_1 = arith.constant 0 : i32
    return %arg0, %c0_i32, %c0_i32_0 : i32, i32, i32
  }
  func.func @transform_3(%arg0: i32) -> (i32, i32, i32) {
    %c0_i32 = arith.constant 0 : i32
    %c0_i32_0 = arith.constant 0 : i32
    %c0_i32_1 = arith.constant 0 : i32
    return %arg0, %c0_i32, %c0_i32_0 : i32, i32, i32
  }
  func.func @transform_4(%arg0: i32) -> (i32, i32, i32) {
    %c0_i32 = arith.constant 0 : i32
    %c0_i32_0 = arith.constant 0 : i32
    %c0_i32_1 = arith.constant 0 : i32
    %c0_i32_2 = arith.constant 0 : i32
    return %c0_i32, %c0_i32_0, %c0_i32_1 : i32, i32, i32
  }
  func.func @transform_5(%arg0: i32) -> (i32, i32, i32) {
    %c0_i32 = arith.constant 0 : i32
    %c0_i32_0 = arith.constant 0 : i32
    %c0_i32_1 = arith.constant 0 : i32
    %c0_i32_2 = arith.constant 0 : i32
    return %c0_i32, %c0_i32_0, %c0_i32_1 : i32, i32, i32
  }
  func.func @transform_6(%arg0: i32) -> (i32, i32, i32) {
    %c0_i32 = arith.constant 0 : i32
    %c0_i32_0 = arith.constant 0 : i32
    %c0_i32_1 = arith.constant 0 : i32
    %c0_i32_2 = arith.constant 0 : i32
    return %c0_i32, %c0_i32_0, %c0_i32_1 : i32, i32, i32
  }
  func.func @transform_7(%arg0: i32) -> (i32, i32, i32) {
    %c0_i32 = arith.constant 0 : i32
    %c0_i32_0 = arith.constant 0 : i32
    %c0_i32_1 = arith.constant 0 : i32
    %c0_i32_2 = arith.constant 0 : i32
    return %c0_i32, %c0_i32_0, %c0_i32_1 : i32, i32, i32
  }
  func.func @transform_8(%arg0: i32) -> (i32, i32, i32) {
    %c0_i32 = arith.constant 0 : i32
    %c0_i32_0 = arith.constant 0 : i32
    %c0_i32_1 = arith.constant 0 : i32
    %c0_i32_2 = arith.constant 0 : i32
    return %c0_i32, %c0_i32_0, %c0_i32_1 : i32, i32, i32
  }
  func.func @transform_9(%arg0: i32) -> (i32, i32, i32) {
    %c0_i32 = arith.constant 0 : i32
    %c0_i32_0 = arith.constant 0 : i32
    %c0_i32_1 = arith.constant 0 : i32
    %c0_i32_2 = arith.constant 0 : i32
    return %c0_i32, %c0_i32_0, %c0_i32_1 : i32, i32, i32
  }
  func.func @transform_10(%arg0: i32) -> (i32, i32, i32) {
    %c0_i32 = arith.constant 0 : i32
    %c0_i32_0 = arith.constant 0 : i32
    %c0_i32_1 = arith.constant 0 : i32
    %c0_i32_2 = arith.constant 0 : i32
    return %c0_i32, %c0_i32_0, %c0_i32_1 : i32, i32, i32
  }
  func.func @transform_11(%arg0: i32) -> (i32, i32) {
    %c0_i32 = arith.constant 0 : i32
    %c0_i32_0 = arith.constant 0 : i32
    %c0_i32_1 = arith.constant 0 : i32
    return %c0_i32, %c0_i32_0 : i32, i32
  }
  func.func @transform_12(%arg0: i32) -> (i32, i32) {
    %c0_i32 = arith.constant 0 : i32
    %c0_i32_0 = arith.constant 0 : i32
    %c0_i32_1 = arith.constant 0 : i32
    return %c0_i32, %c0_i32_0 : i32, i32
  }
  func.func @transform_13(%arg0: i32) -> (i32, i32) {
    %c0_i32 = arith.constant 0 : i32
    %c0_i32_0 = arith.constant 0 : i32
    %c0_i32_1 = arith.constant 0 : i32
    return %c0_i32, %c0_i32_0 : i32, i32
  }
  func.func @transform_14(%arg0: i32) -> (i32, i32) {
    %c0_i32 = arith.constant 0 : i32
    %c0_i32_0 = arith.constant 0 : i32
    return %arg0, %c0_i32 : i32, i32
  }
  func.func @transform_15(%arg0: i32) -> (i32, i32, i32) {
    %c0_i32 = arith.constant 0 : i32
    %c0_i32_0 = arith.constant 0 : i32
    %c0_i32_1 = arith.constant 0 : i32
    return %c0_i32, %arg0, %c0_i32_0 : i32, i32, i32
  }
}

</mosaic_0001>

<llo_original>
// kernel: tpu_custom_call.1
$region0: #{tpu_custom_call.1}
  #allocation0 [shape = 'u32[]', space=smem, size = 0x4, offset = 0x4, fixed_abs, tag = 'smem constant byte address 0x4 - core index']
  #allocation1 [shape = 'u32[72,128]{1,0:T(1,128)}', space=vmem, size = 0x9000, scoped, tag = 'internal scratch']
  %s0 = inlined_call_operand.vmem [shape: f32[2,8,32], index: 0, kind: input, shape index: {}]
  %s1 = inlined_call_operand.vmem [shape: f32[2,8,32], index: 1, kind: input, shape index: {}]
  %s2 = inlined_call_operand.vmem [shape: f32[2,8,32], index: 2, kind: input, shape index: {}]
  %s3 = inlined_call_operand.vmem [shape: f32[2,8,8], index: 3, kind: input, shape index: {}]
  %s4 = inlined_call_operand.vmem [shape: f32[4,32,8], index: 4, kind: input, shape index: {}]
  %s5 = inlined_call_operand.vmem [shape: f32[4,1,8], index: 5, kind: input, shape index: {}]
  %s6 = inlined_call_operand.vmem [shape: f32[4,32,8], index: 6, kind: input, shape index: {}]
  %s7 = inlined_call_operand.vmem [shape: f32[4,1,8], index: 7, kind: input, shape index: {}]
  %s8 = inlined_call_operand.vmem [shape: f32[4,32,8], index: 8, kind: input, shape index: {}]
  %s9 = inlined_call_operand.vmem [shape: f32[4,1,8], index: 9, kind: input, shape index: {}]
  %s10 = inlined_call_operand.vmem [shape: f32[4,8,32], index: 10, kind: input, shape index: {}]
  %s11 = inlined_call_operand.vmem [shape: f32[1,32], index: 11, kind: input, shape index: {}]
  %s12 = inlined_call_operand.vmem [shape: f32[1,32], index: 12, kind: input, shape index: {}]
  %s13 = inlined_call_operand.vmem [shape: f32[1,32], index: 13, kind: input, shape index: {}]
  %s14 = inlined_call_operand.hbm [shape: f32[16,32], index: 14, kind: output, shape index: {0}]
  %s15 = inlined_call_operand.vmem [shape: f32[4,16,8], index: 15, kind: output, shape index: {1}]
  %16 = xla_tuple %s14, %s15
  %s17 = sld [smem:[#allocation0]]
  $region131: #{tpu_custom_call.1} parent=0
    _
  %s19 = ssub.s32 1, %s17
  %s20 = scalar_select 0, %s19, %s17
  $region1: #{tpu_custom_call.1} parent=0
    #allocation2 [shape = 'u8[8192]{0}', space=vmem, size = 0x2000, scoped, tag = 'output window, operand 0']
    #allocation3 [shape = 's32[2]{0}', space=sflag, size = 0x8, scoped, tag = 'scoped memory for tpu_custom_call.1']
    #allocation4 [shape = 'u8[32768]{0}', space=vmem, size = 0x8000, scoped, tag = 'output window, operand 1']
    %21 = vsyncpa [#allocation3], 0
    %s22 = scalar_lea.sflag [#allocation3], 1
    %23 = vsyncpa %s22, 0
    loop: start=0, step=1, limit=4
    $region2: #{tpu_custom_call.1} parent=1 // loop_pre_header
      _
    $region3: #{tpu_custom_call.1} parent=1 // loop_header
      %s25 = sphi 0, %s29
      %p26 = scmp.ge.s32.totalorder %s25, 4
      %s35 = sphi 0, %s37
      %s38 = sphi 0, %s35
      %s39 = sphi 0, %s38
      %s55 = sphi 0, %s39
      %s61 = sphi 0, %s63
      %s64 = sphi 0, %s61
      %s65 = sphi 0, %s64
      %s81 = sphi 0, %s65
      %s87 = sphi 0, %s89
      %s90 = sphi 0, %s87
      %s91 = sphi 0, %s90
      %s107 = sphi 0, %s91
      %s113 = sphi 0, %s115
      %s116 = sphi 0, %s113
      %s117 = sphi 0, %s116
      %s133 = sphi 0, %s117
      %s137 = sphi 0, %s137
      %s139 = sphi 0, %s137
      %s140 = sphi 0, %s139
      %s154 = sphi 0, %s140
      %s158 = sphi 0, %s158
      %s160 = sphi 0, %s158
      %s161 = sphi 0, %s160
      %s175 = sphi 0, %s161
      %s179 = sphi 0, %s179
      %s181 = sphi 0, %s179
      %s182 = sphi 0, %s181
      %s196 = sphi 0, %s182
      %s200 = sphi 0, %s200
      %s202 = sphi 0, %s200
      %s203 = sphi 0, %s202
      %s217 = sphi 0, %s203
      %s221 = sphi 0, %s221
      %s223 = sphi 0, %s221
      %s224 = sphi 0, %s223
      %s238 = sphi 0, %s224
      %s242 = sphi 0, %s242
      %s244 = sphi 0, %s242
      %s245 = sphi 0, %s244
      %s259 = sphi 0, %s245
      %s263 = sphi 0, %s263
      %s265 = sphi 0, %s263
      %s266 = sphi 0, %s265
      %s280 = sphi 0, %s266
      %s284 = sphi 0, %s284
      %s286 = sphi 0, %s284
      %s287 = sphi 0, %s286
      %s301 = sphi 0, %s287
      %s305 = sphi 0, %s305
      %s307 = sphi 0, %s305
      %s308 = sphi 0, %s307
      %s322 = sphi 0, %s308
      %s326 = sphi 0, %s326
      %s328 = sphi 0, %s326
      %s329 = sphi 0, %s328
      %s343 = sphi 0, %s329
      %s349 = sphi 0, %s351
      %s352 = sphi 0, %s349
      %s353 = sphi 0, %s352
      %s369 = sphi 0, %s353
      %s375 = sphi 0, %s377
      %s378 = sphi 0, %s375
      %s379 = sphi 0, %s378
      %s395 = sphi 0, %s379
    $region4: #{tpu_custom_call.1} parent=1 // loop_header_branch
      %28 = sbr.rel (%p26) target = $region8
    $region5: #{tpu_custom_call.1} parent=1 // loop_body
      %s30 = ssub.s32 %s25, 1
      %s31 = ssub.s32 %s25, 2
      %s32 = sadd.s32 %s25, 1
      %s33 = ssub.s32 %s25, %s32
      %p34 = scmp.eq.s32.totalorder %s33, 0
      %s36 = sadd.s32 %s35, 1
      %s37 = scalar_select %p34, %s35, %s36
      %p40 = pneg %p34
      %p41 = scmp.eq.s32.totalorder %s25, 1
      %p42 = por %p40, %p41
      %p43 = scmp.ne.s32.totalorder %s35, %s38
      %p44 = scmp.eq.s32.totalorder %s25, 0
      %p45 = por %p43, %p44
      %p46 = scmp.ne.s32.totalorder %s35, %s38
      %p47 = scmp.eq.s32.totalorder %s30, 1
      %p48 = por %p46, %p47
      %p49 = scmp.ne.s32.totalorder %s38, %s39
      %p50 = scmp.eq.s32.totalorder %s30, 0
      %p51 = por %p49, %p50
      %p52 = scmp.ne.s32.totalorder %s38, %s39
      %p53 = scmp.eq.s32.totalorder %s31, 1
      %p54 = por %p52, %p53
      %p56 = scmp.ne.s32.totalorder %s39, %s55
      %p57 = scmp.eq.s32.totalorder %s31, 0
      %p58 = por %p56, %p57
      %s59 = ssub.s32 %s25, %s32
      %p60 = scmp.eq.s32.totalorder %s59, 0
      %s62 = sadd.s32 %s61, 1
      %s63 = scalar_select %p60, %s61, %s62
      %p66 = pneg %p60
      %p67 = scmp.eq.s32.totalorder %s25, 1
      %p68 = por %p66, %p67
      %p69 = scmp.ne.s32.totalorder %s61, %s64
      %p70 = scmp.eq.s32.totalorder %s25, 0
      %p71 = por %p69, %p70
      %p72 = scmp.ne.s32.totalorder %s61, %s64
      %p73 = scmp.eq.s32.totalorder %s30, 1
      %p74 = por %p72, %p73
      %p75 = scmp.ne.s32.totalorder %s64, %s65
      %p76 = scmp.eq.s32.totalorder %s30, 0
      %p77 = por %p75, %p76
      %p78 = scmp.ne.s32.totalorder %s64, %s65
      %p79 = scmp.eq.s32.totalorder %s31, 1
      %p80 = por %p78, %p79
      %p82 = scmp.ne.s32.totalorder %s65, %s81
      %p83 = scmp.eq.s32.totalorder %s31, 0
      %p84 = por %p82, %p83
      %s85 = ssub.s32 %s25, %s32
      %p86 = scmp.eq.s32.totalorder %s85, 0
      %s88 = sadd.s32 %s87, 1
      %s89 = scalar_select %p86, %s87, %s88
      %p92 = pneg %p86
      %p93 = scmp.eq.s32.totalorder %s25, 1
      %p94 = por %p92, %p93
      %p95 = scmp.ne.s32.totalorder %s87, %s90
      %p96 = scmp.eq.s32.totalorder %s25, 0
      %p97 = por %p95, %p96
      %p98 = scmp.ne.s32.totalorder %s87, %s90
      %p99 = scmp.eq.s32.totalorder %s30, 1
      %p100 = por %p98, %p99
      %p101 = scmp.ne.s32.totalorder %s90, %s91
      %p102 = scmp.eq.s32.totalorder %s30, 0
      %p103 = por %p101, %p102
      %p104 = scmp.ne.s32.totalorder %s90, %s91
      %p105 = scmp.eq.s32.totalorder %s31, 1
      %p106 = por %p104, %p105
      %p108 = scmp.ne.s32.totalorder %s91, %s107
      %p109 = scmp.eq.s32.totalorder %s31, 0
      %p110 = por %p108, %p109
      %s111 = ssub.s32 %s25, %s32
      %p112 = scmp.eq.s32.totalorder %s111, 0
      %s114 = sadd.s32 %s113, 1
      %s115 = scalar_select %p112, %s113, %s114
      %p118 = pneg %p112
      %p119 = scmp.eq.s32.totalorder %s25, 1
      %p120 = por %p118, %p119
      %p121 = scmp.ne.s32.totalorder %s113, %s116
      %p122 = scmp.eq.s32.totalorder %s25, 0
      %p123 = por %p121, %p122
      %p124 = scmp.ne.s32.totalorder %s113, %s116
      %p125 = scmp.eq.s32.totalorder %s30, 1
      %p126 = por %p124, %p125
      %p127 = scmp.ne.s32.totalorder %s116, %s117
      %p128 = scmp.eq.s32.totalorder %s30, 0
      %p129 = por %p127, %p128
      %p130 = scmp.ne.s32.totalorder %s116, %s117
      %p131 = scmp.eq.s32.totalorder %s31, 1
      %p132 = por %p130, %p131
      %p134 = scmp.ne.s32.totalorder %s117, %s133
      %p135 = scmp.eq.s32.totalorder %s31, 0
      %p136 = por %p134, %p135
      %s138 = sadd.s32 %s137, 1
      %p141 = scmp.eq.s32.totalorder %s25, 1
      %p142 = scmp.ne.s32.totalorder %s137, %s139
      %p143 = scmp.eq.s32.totalorder %s25, 0
      %p144 = por %p142, %p143
      %p145 = scmp.ne.s32.totalorder %s137, %s139
      %p146 = scmp.eq.s32.totalorder %s30, 1
      %p147 = por %p145, %p146
      %p148 = scmp.ne.s32.totalorder %s139, %s140
      %p149 = scmp.eq.s32.totalorder %s30, 0
      %p150 = por %p148, %p149
      %p151 = scmp.ne.s32.totalorder %s139, %s140
      %p152 = scmp.eq.s32.totalorder %s31, 1
      %p153 = por %p151, %p152
      %p155 = scmp.ne.s32.totalorder %s140, %s154
      %p156 = scmp.eq.s32.totalorder %s31, 0
      %p157 = por %p155, %p156
      %s159 = sadd.s32 %s158, 1
      %p162 = scmp.eq.s32.totalorder %s25, 1
      %p163 = scmp.ne.s32.totalorder %s158, %s160
      %p164 = scmp.eq.s32.totalorder %s25, 0
      %p165 = por %p163, %p164
      %p166 = scmp.ne.s32.totalorder %s158, %s160
      %p167 = scmp.eq.s32.totalorder %s30, 1
      %p168 = por %p166, %p167
      %p169 = scmp.ne.s32.totalorder %s160, %s161
      %p170 = scmp.eq.s32.totalorder %s30, 0
      %p171 = por %p169, %p170
      %p172 = scmp.ne.s32.totalorder %s160, %s161
      %p173 = scmp.eq.s32.totalorder %s31, 1
      %p174 = por %p172, %p173
      %p176 = scmp.ne.s32.totalorder %s161, %s175
      %p177 = scmp.eq.s32.totalorder %s31, 0
      %p178 = por %p176, %p177
      %s180 = sadd.s32 %s179, 1
      %p183 = scmp.eq.s32.totalorder %s25, 1
      %p184 = scmp.ne.s32.totalorder %s179, %s181
      %p185 = scmp.eq.s32.totalorder %s25, 0
      %p186 = por %p184, %p185
      %p187 = scmp.ne.s32.totalorder %s179, %s181
      %p188 = scmp.eq.s32.totalorder %s30, 1
      %p189 = por %p187, %p188
      %p190 = scmp.ne.s32.totalorder %s181, %s182
      %p191 = scmp.eq.s32.totalorder %s30, 0
      %p192 = por %p190, %p191
      %p193 = scmp.ne.s32.totalorder %s181, %s182
      %p194 = scmp.eq.s32.totalorder %s31, 1
      %p195 = por %p193, %p194
      %p197 = scmp.ne.s32.totalorder %s182, %s196
      %p198 = scmp.eq.s32.totalorder %s31, 0
      %p199 = por %p197, %p198
      %s201 = sadd.s32 %s200, 1
      %p204 = scmp.eq.s32.totalorder %s25, 1
      %p205 = scmp.ne.s32.totalorder %s200, %s202
      %p206 = scmp.eq.s32.totalorder %s25, 0
      %p207 = por %p205, %p206
      %p208 = scmp.ne.s32.totalorder %s200, %s202
      %p209 = scmp.eq.s32.totalorder %s30, 1
      %p210 = por %p208, %p209
      %p211 = scmp.ne.s32.totalorder %s202, %s203
      %p212 = scmp.eq.s32.totalorder %s30, 0
      %p213 = por %p211, %p212
      %p214 = scmp.ne.s32.totalorder %s202, %s203
      %p215 = scmp.eq.s32.totalorder %s31, 1
      %p216 = por %p214, %p215
      %p218 = scmp.ne.s32.totalorder %s203, %s217
      %p219 = scmp.eq.s32.totalorder %s31, 0
      %p220 = por %p218, %p219
      %s222 = sadd.s32 %s221, 1
      %p225 = scmp.eq.s32.totalorder %s25, 1
      %p226 = scmp.ne.s32.totalorder %s221, %s223
      %p227 = scmp.eq.s32.totalorder %s25, 0
      %p228 = por %p226, %p227
      %p229 = scmp.ne.s32.totalorder %s221, %s223
      %p230 = scmp.eq.s32.totalorder %s30, 1
      %p231 = por %p229, %p230
      %p232 = scmp.ne.s32.totalorder %s223, %s224
      %p233 = scmp.eq.s32.totalorder %s30, 0
      %p234 = por %p232, %p233
      %p235 = scmp.ne.s32.totalorder %s223, %s224
      %p236 = scmp.eq.s32.totalorder %s31, 1
      %p237 = por %p235, %p236
      %p239 = scmp.ne.s32.totalorder %s224, %s238
      %p240 = scmp.eq.s32.totalorder %s31, 0
      %p241 = por %p239, %p240
      %s243 = sadd.s32 %s242, 1
      %p246 = scmp.eq.s32.totalorder %s25, 1
      %p247 = scmp.ne.s32.totalorder %s242, %s244
      %p248 = scmp.eq.s32.totalorder %s25, 0
      %p249 = por %p247, %p248
      %p250 = scmp.ne.s32.totalorder %s242, %s244
      %p251 = scmp.eq.s32.totalorder %s30, 1
      %p252 = por %p250, %p251
      %p253 = scmp.ne.s32.totalorder %s244, %s245
      %p254 = scmp.eq.s32.totalorder %s30, 0
      %p255 = por %p253, %p254
      %p256 = scmp.ne.s32.totalorder %s244, %s245
      %p257 = scmp.eq.s32.totalorder %s31, 1
      %p258 = por %p256, %p257
      %p260 = scmp.ne.s32.totalorder %s245, %s259
      %p261 = scmp.eq.s32.totalorder %s31, 0
      %p262 = por %p260, %p261
      %s264 = sadd.s32 %s263, 1
      %p267 = scmp.eq.s32.totalorder %s25, 1
      %p268 = scmp.ne.s32.totalorder %s263, %s265
      %p269 = scmp.eq.s32.totalorder %s25, 0
      %p270 = por %p268, %p269
      %p271 = scmp.ne.s32.totalorder %s263, %s265
      %p272 = scmp.eq.s32.totalorder %s30, 1
      %p273 = por %p271, %p272
      %p274 = scmp.ne.s32.totalorder %s265, %s266
      %p275 = scmp.eq.s32.totalorder %s30, 0
      %p276 = por %p274, %p275
      %p277 = scmp.ne.s32.totalorder %s265, %s266
      %p278 = scmp.eq.s32.totalorder %s31, 1
      %p279 = por %p277, %p278
      %p281 = scmp.ne.s32.totalorder %s266, %s280
      %p282 = scmp.eq.s32.totalorder %s31, 0
      %p283 = por %p281, %p282
      %s285 = sadd.s32 %s284, 1
      %p288 = scmp.eq.s32.totalorder %s25, 1
      %p289 = scmp.ne.s32.totalorder %s284, %s286
      %p290 = scmp.eq.s32.totalorder %s25, 0
      %p291 = por %p289, %p290
      %p292 = scmp.ne.s32.totalorder %s284, %s286
      %p293 = scmp.eq.s32.totalorder %s30, 1
      %p294 = por %p292, %p293
      %p295 = scmp.ne.s32.totalorder %s286, %s287
      %p296 = scmp.eq.s32.totalorder %s30, 0
      %p297 = por %p295, %p296
      %p298 = scmp.ne.s32.totalorder %s286, %s287
      %p299 = scmp.eq.s32.totalorder %s31, 1
      %p300 = por %p298, %p299
      %p302 = scmp.ne.s32.totalorder %s287, %s301
      %p303 = scmp.eq.s32.totalorder %s31, 0
      %p304 = por %p302, %p303
      %s306 = sadd.s32 %s305, 1
      %p309 = scmp.eq.s32.totalorder %s25, 1
      %p310 = scmp.ne.s32.totalorder %s305, %s307
      %p311 = scmp.eq.s32.totalorder %s25, 0
      %p312 = por %p310, %p311
      %p313 = scmp.ne.s32.totalorder %s305, %s307
      %p314 = scmp.eq.s32.totalorder %s30, 1
      %p315 = por %p313, %p314
      %p316 = scmp.ne.s32.totalorder %s307, %s308
      %p317 = scmp.eq.s32.totalorder %s30, 0
      %p318 = por %p316, %p317
      %p319 = scmp.ne.s32.totalorder %s307, %s308
      %p320 = scmp.eq.s32.totalorder %s31, 1
      %p321 = por %p319, %p320
      %p323 = scmp.ne.s32.totalorder %s308, %s322
      %p324 = scmp.eq.s32.totalorder %s31, 0
      %p325 = por %p323, %p324
      %s327 = sadd.s32 %s326, 1
      %p330 = scmp.eq.s32.totalorder %s25, 1
      %p331 = scmp.ne.s32.totalorder %s326, %s328
      %p332 = scmp.eq.s32.totalorder %s25, 0
      %p333 = por %p331, %p332
      %p334 = scmp.ne.s32.totalorder %s326, %s328
      %p335 = scmp.eq.s32.totalorder %s30, 1
      %p336 = por %p334, %p335
      %p337 = scmp.ne.s32.totalorder %s328, %s329
      %p338 = scmp.eq.s32.totalorder %s30, 0
      %p339 = por %p337, %p338
      %p340 = scmp.ne.s32.totalorder %s328, %s329
      %p341 = scmp.eq.s32.totalorder %s31, 1
      %p342 = por %p340, %p341
      %p344 = scmp.ne.s32.totalorder %s329, %s343
      %p345 = scmp.eq.s32.totalorder %s31, 0
      %p346 = por %p344, %p345
      %s347 = ssub.s32 %s25, %s32
      %p348 = scmp.eq.s32.totalorder %s347, 0
      %s350 = sadd.s32 %s349, 1
      %s351 = scalar_select %p348, %s349, %s350
      %p354 = pneg %p348
      %p355 = scmp.eq.s32.totalorder %s25, 1
      %p356 = por %p354, %p355
      %p357 = scmp.ne.s32.totalorder %s349, %s352
      %p358 = scmp.eq.s32.totalorder %s25, 0
      %p359 = por %p357, %p358
      %p360 = scmp.ne.s32.totalorder %s349, %s352
      %p361 = scmp.eq.s32.totalorder %s30, 1
      %p362 = por %p360, %p361
      %p363 = scmp.ne.s32.totalorder %s352, %s353
      %p364 = scmp.eq.s32.totalorder %s30, 0
      %p365 = por %p363, %p364
      %p366 = scmp.ne.s32.totalorder %s352, %s353
      %p367 = scmp.eq.s32.totalorder %s31, 1
      %p368 = por %p366, %p367
      %p370 = scmp.ne.s32.totalorder %s353, %s369
      %p371 = scmp.eq.s32.totalorder %s31, 0
      %p372 = por %p370, %p371
      %s373 = ssub.s32 %s25, %s32
      %p374 = scmp.eq.s32.totalorder %s373, 0
      %s376 = sadd.s32 %s375, 1
      %s377 = scalar_select %p374, %s375, %s376
      %p380 = pneg %p374
      %p381 = scmp.eq.s32.totalorder %s25, 1
      %p382 = por %p380, %p381
      %p383 = scmp.ne.s32.totalorder %s375, %s378
      %p384 = scmp.eq.s32.totalorder %s25, 0
      %p385 = por %p383, %p384
      %p386 = scmp.ne.s32.totalorder %s375, %s378
      %p387 = scmp.eq.s32.totalorder %s30, 1
      %p388 = por %p386, %p387
      %p389 = scmp.ne.s32.totalorder %s378, %s379
      %p390 = scmp.eq.s32.totalorder %s30, 0
      %p391 = por %p389, %p390
      %p392 = scmp.ne.s32.totalorder %s378, %s379
      %p393 = scmp.eq.s32.totalorder %s31, 1
      %p394 = por %p392, %p393
      %p396 = scmp.ne.s32.totalorder %s379, %s395
      %p397 = scmp.eq.s32.totalorder %s31, 0
      %p398 = por %p396, %p397
      %p399 = scmp.le.s32.totalorder 1, %s25
      %p400 = scmp.lt.s32.totalorder %s25, 3
      %p401 = pnand %p399, %p400
      %p402 = pneg %p401
      // Predicated region
      $region9: #{tpu_custom_call.1} parent=5 // pred_check
        _
      $region10: #{tpu_custom_call.1} parent=5 // pred_check_branch
        %404 = sbr.rel (%p401) target = $region12
      $region11: #{tpu_custom_call.1} parent=5 // pred_region
        %s405 = ssub.s32 %s25, 1
        // Predicated region
        $region13: #{tpu_custom_call.1} parent=11 // pred_check
          %p406 = pneg %p150
        $region14: #{tpu_custom_call.1} parent=11 // pred_check_branch
          %408 = sbr.rel (%p406) target = $region16
        $region15: #{tpu_custom_call.1} parent=11 // pred_region
          _
        $region16: #{tpu_custom_call.1} parent=11 // pred_fallthru
          _
        // Predicated region
        $region17: #{tpu_custom_call.1} parent=11 // pred_check
          %p409 = pneg %p171
        $region18: #{tpu_custom_call.1} parent=11 // pred_check_branch
          %411 = sbr.rel (%p409) target = $region20
        $region19: #{tpu_custom_call.1} parent=11 // pred_region
          _
        $region20: #{tpu_custom_call.1} parent=11 // pred_fallthru
          _
        // Predicated region
        $region21: #{tpu_custom_call.1} parent=11 // pred_check
          %p412 = pneg %p192
        $region22: #{tpu_custom_call.1} parent=11 // pred_check_branch
          %414 = sbr.rel (%p412) target = $region24
        $region23: #{tpu_custom_call.1} parent=11 // pred_region
          _
        $region24: #{tpu_custom_call.1} parent=11 // pred_fallthru
          _
        // Predicated region
        $region25: #{tpu_custom_call.1} parent=11 // pred_check
          %p415 = pneg %p213
        $region26: #{tpu_custom_call.1} parent=11 // pred_check_branch
          %417 = sbr.rel (%p415) target = $region28
        $region27: #{tpu_custom_call.1} parent=11 // pred_region
          _
        $region28: #{tpu_custom_call.1} parent=11 // pred_fallthru
          _
        // Predicated region
        $region29: #{tpu_custom_call.1} parent=11 // pred_check
          %p418 = pneg %p234
        $region30: #{tpu_custom_call.1} parent=11 // pred_check_branch
          %420 = sbr.rel (%p418) target = $region32
        $region31: #{tpu_custom_call.1} parent=11 // pred_region
          _
        $region32: #{tpu_custom_call.1} parent=11 // pred_fallthru
          _
        // Predicated region
        $region33: #{tpu_custom_call.1} parent=11 // pred_check
          %p421 = pneg %p255
        $region34: #{tpu_custom_call.1} parent=11 // pred_check_branch
          %423 = sbr.rel (%p421) target = $region36
        $region35: #{tpu_custom_call.1} parent=11 // pred_region
          _
        $region36: #{tpu_custom_call.1} parent=11 // pred_fallthru
          _
        // Predicated region
        $region37: #{tpu_custom_call.1} parent=11 // pred_check
          %p424 = pneg %p276
        $region38: #{tpu_custom_call.1} parent=11 // pred_check_branch
          %426 = sbr.rel (%p424) target = $region40
        $region39: #{tpu_custom_call.1} parent=11 // pred_region
          _
        $region40: #{tpu_custom_call.1} parent=11 // pred_fallthru
          _
        // Predicated region
        $region41: #{tpu_custom_call.1} parent=11 // pred_check
          %p427 = pneg %p297
        $region42: #{tpu_custom_call.1} parent=11 // pred_check_branch
          %429 = sbr.rel (%p427) target = $region44
        $region43: #{tpu_custom_call.1} parent=11 // pred_region
          _
        $region44: #{tpu_custom_call.1} parent=11 // pred_fallthru
          _
        // Predicated region
        $region45: #{tpu_custom_call.1} parent=11 // pred_check
          %p430 = pneg %p318
        $region46: #{tpu_custom_call.1} parent=11 // pred_check_branch
          %432 = sbr.rel (%p430) target = $region48
        $region47: #{tpu_custom_call.1} parent=11 // pred_region
          _
        $region48: #{tpu_custom_call.1} parent=11 // pred_fallthru
          _
        // Predicated region
        $region49: #{tpu_custom_call.1} parent=11 // pred_check
          %p433 = pneg %p339
        $region50: #{tpu_custom_call.1} parent=11 // pred_check_branch
          %435 = sbr.rel (%p433) target = $region52
        $region51: #{tpu_custom_call.1} parent=11 // pred_region
          _
        $region52: #{tpu_custom_call.1} parent=11 // pred_fallthru
          _
      $region12: #{tpu_custom_call.1} parent=5 // pred_fallthru
        _
      %p436 = scmp.lt.s32.totalorder %s25, 2
      // Predicated region
      $region53: #{tpu_custom_call.1} parent=5 // pred_check
        %p437 = pneg %p436
      $region54: #{tpu_custom_call.1} parent=5 // pred_check_branch
        %439 = sbr.rel (%p437) target = $region56
      $region55: #{tpu_custom_call.1} parent=5 // pred_region
        // Predicated region
        $region57: #{tpu_custom_call.1} parent=55 // pred_check
          %p440 = pneg %p45
        $region58: #{tpu_custom_call.1} parent=55 // pred_check_branch
          %442 = sbr.rel (%p440) target = $region60
        $region59: #{tpu_custom_call.1} parent=55 // pred_region
          %p443 = scmp.lt.s32.totalorder %s25, 1
          %s444 = scalar_select %p443, %s25, 1
          %s445 = smul.addr %s444, 8
          %s446 = scalar_lea.vmem %s0, %s445
        $region60: #{tpu_custom_call.1} parent=55 // pred_fallthru
          _
        // Predicated region
        $region61: #{tpu_custom_call.1} parent=55 // pred_check
          %p447 = pneg %p71
        $region62: #{tpu_custom_call.1} parent=55 // pred_check_branch
          %449 = sbr.rel (%p447) target = $region64
        $region63: #{tpu_custom_call.1} parent=55 // pred_region
          %p450 = scmp.lt.s32.totalorder %s25, 1
          %s451 = scalar_select %p450, %s25, 1
          %s452 = smul.addr %s451, 8
          %s453 = scalar_lea.vmem %s1, %s452
        $region64: #{tpu_custom_call.1} parent=55 // pred_fallthru
          _
        // Predicated region
        $region65: #{tpu_custom_call.1} parent=55 // pred_check
          %p454 = pneg %p97
        $region66: #{tpu_custom_call.1} parent=55 // pred_check_branch
          %456 = sbr.rel (%p454) target = $region68
        $region67: #{tpu_custom_call.1} parent=55 // pred_region
          %p457 = scmp.lt.s32.totalorder %s25, 1
          %s458 = scalar_select %p457, %s25, 1
          %s459 = smul.addr %s458, 8
          %s460 = scalar_lea.vmem %s2, %s459
        $region68: #{tpu_custom_call.1} parent=55 // pred_fallthru
          _
        // Predicated region
        $region69: #{tpu_custom_call.1} parent=55 // pred_check
          %p461 = pneg %p123
        $region70: #{tpu_custom_call.1} parent=55 // pred_check_branch
          %463 = sbr.rel (%p461) target = $region72
        $region71: #{tpu_custom_call.1} parent=55 // pred_region
          %p464 = scmp.lt.s32.totalorder %s25, 1
          %s465 = scalar_select %p464, %s25, 1
          %s466 = smul.addr %s465, 8
          %s467 = scalar_lea.vmem %s3, %s466
        $region72: #{tpu_custom_call.1} parent=55 // pred_fallthru
          _
      $region56: #{tpu_custom_call.1} parent=5 // pred_fallthru
        _
      %p468 = scmp.le.s32.totalorder 1, %s25
      %p469 = scmp.lt.s32.totalorder %s25, 3
      %p470 = pnand %p468, %p469
      %p471 = pneg %p470
      // Predicated region
      $region73: #{tpu_custom_call.1} parent=5 // pred_check
        _
      $region74: #{tpu_custom_call.1} parent=5 // pred_check_branch
        %473 = sbr.rel (%p470) target = $region76
      $region75: #{tpu_custom_call.1} parent=5 // pred_region
        %s474 = ssub.s32 %s25, 1
        %p475 = scmp.lt.s32.totalorder %s30, 1
        %s476 = scalar_select %p475, %s30, 1
        %s477 = smul.addr %s476, 8
        %s478 = scalar_lea.vmem %s0, %s477
        %p479 = pneg %p51
        %p480 = pneg %p48
        %p481 = scmp.lt.s32.totalorder %s30, 1
        %s482 = scalar_select %p481, %s30, 1
        %s483 = smul.addr %s482, 8
        %s484 = scalar_lea.vmem %s1, %s483
        %p485 = pneg %p77
        %p486 = pneg %p74
        %p487 = scmp.lt.s32.totalorder %s30, 1
        %s488 = scalar_select %p487, %s30, 1
        %s489 = smul.addr %s488, 8
        %s490 = scalar_lea.vmem %s2, %s489
        %p491 = pneg %p103
        %p492 = pneg %p100
        %p493 = scmp.lt.s32.totalorder %s30, 1
        %s494 = scalar_select %p493, %s30, 1
        %s495 = smul.addr %s494, 8
        %s496 = scalar_lea.vmem %s3, %s495
        %p497 = pneg %p129
        %p498 = pneg %p126
        %p499 = pneg %p150
        %p500 = pneg %p147
        %p501 = pneg %p171
        %p502 = pneg %p168
        %p503 = pneg %p192
        %p504 = pneg %p189
        %p505 = pneg %p213
        %p506 = pneg %p210
        %p507 = pneg %p234
        %p508 = pneg %p231
        %p509 = pneg %p255
        %p510 = pneg %p252
        %p511 = pneg %p276
        %p512 = pneg %p273
        %p513 = pneg %p297
        %p514 = pneg %p294
        %p515 = pneg %p318
        %p516 = pneg %p315
        %p517 = pneg %p339
        %p518 = pneg %p336
        %p519 = pneg %p365
        %p520 = pneg %p362
        %s521 = sand.u32 %s352, 1
        %s522 = scalar_lea.sflag [#allocation3], %s521
        %s523 = sand.u32 %s352, 1
        %s524 = smul.addr %s523, 8
        %s525 = scalar_lea.vmem [#allocation2], %s524
        %p526 = pneg %p391
        %p527 = pneg %p388
        %s528 = sand.u32 %s378, 1
        %s529 = sand.u32 %s378, 1
        %s530 = smul.addr %s529, 32
        %s531 = scalar_lea.vmem [#allocation4], %s530
        %p532 = scmp.lt.s32.totalorder %s30, 1
        %s533 = scalar_select %p532, %s30, 1
        %s534 = smul.addr %s533, 8
        %s535 = scalar_lea.vmem %s0, %s534
        %p536 = scmp.lt.s32.totalorder %s30, 1
        %s537 = scalar_select %p536, %s30, 1
        %s538 = smul.addr %s537, 8
        %s539 = scalar_lea.vmem %s1, %s538
        %p540 = scmp.lt.s32.totalorder %s30, 1
        %s541 = scalar_select %p540, %s30, 1
        %s542 = smul.addr %s541, 8
        %s543 = scalar_lea.vmem %s2, %s542
        %p544 = scmp.lt.s32.totalorder %s30, 1
        %s545 = scalar_select %p544, %s30, 1
        %s546 = smul.addr %s545, 8
        %s547 = scalar_lea.vmem %s3, %s546
        %v548 = vld [vmem:[%s535] sm:$0xff]
        %v549 = vld [vmem:[%s539] sm:$0xff]
        %v550 = vld [vmem:[%s543] sm:$0xff]
        %v551 = vld [vmem:[%s4] sm:$0xff]
        %v552 = vld [vmem:[%s4 + $0x8] sm:$0xff]
        %v553 = vld [vmem:[%s4 + $0x10] sm:$0xff]
        %v554 = vld [vmem:[%s4 + $0x18] sm:$0xff]
        %v555 = vld [vmem:[%s4 + $0x20] sm:$0xff]
        %v556 = vld [vmem:[%s4 + $0x28] sm:$0xff]
        %v557 = vld [vmem:[%s4 + $0x30] sm:$0xff]
        %v558 = vld [vmem:[%s4 + $0x38] sm:$0xff]
        %v559 = vld [vmem:[%s4 + $0x40] sm:$0xff]
        %v560 = vld [vmem:[%s4 + $0x48] sm:$0xff]
        %v561 = vld [vmem:[%s4 + $0x50] sm:$0xff]
        %v562 = vld [vmem:[%s4 + $0x58] sm:$0xff]
        %v563 = vld [vmem:[%s4 + $0x60] sm:$0xff]
        %v564 = vld [vmem:[%s4 + $0x68] sm:$0xff]
        %v565 = vld [vmem:[%s4 + $0x70] sm:$0xff]
        %v566 = vld [vmem:[%s4 + $0x78] sm:$0xff]
        %v567 = vld [vmem:[%s5] sm:$0x1]
        %v568 = vld [vmem:[%s5 + $0x1] sm:$0x1]
        %v569 = vld [vmem:[%s5 + $0x2] sm:$0x1]
        %v570 = vld [vmem:[%s5 + $0x3] sm:$0x1]
        %v575 = vperm.slane %v567, 0
        %v576 = vperm.slane %v568, 0
        %v577 = vperm.slane %v569, 0
        %v578 = vperm.slane %v570, 0
        %vm583 = vcmask 261120
        %v585 = vsel %vm583, %v548, 0
        %587 = vmatpush.msra.mxu0 0.0
        %588 = vmatpush.msra.mxu0 0.0
        %589 = vmatpush.msra.mxu0 0.0
        %590 = vmatpush.msra.mxu0 0.0
        %591 = vmatpush.msra.mxu0 0.0
        %592 = vmatpush.msra.mxu0 0.0
        %593 = vmatpush.msra.mxu0 0.0
        %594 = vmatpush.msra.mxu0 0.0
        %595 = vmatpush.msra.mxu0 0.0
        %596 = vmatpush.msra.mxu0 0.0
        %597 = vmatpush.msra.mxu0 0.0
        %598 = vmatpush.msra.mxu0 0.0
        %599 = vmatpush.msra.mxu0 %v554
        %600 = vmatpush.msra.mxu0 %v553
        %601 = vmatpush.msra.mxu0 %v552
        %602 = vmatpush.msra.mxu0 %v551
        %603 = vmatmul.f32.gmra.mxu0 %v585
        %v604 = vpop.f32.mrf.mxu0
        %v605 = vadd.f32 %v575, %v604
        %606 = vdwg.mxu0
        %607 = vmatpush.msra.mxu0 0.0
        %608 = vmatpush.msra.mxu0 0.0
        %609 = vmatpush.msra.mxu0 0.0
        %610 = vmatpush.msra.mxu0 0.0
        %611 = vmatpush.msra.mxu0 0.0
        %612 = vmatpush.msra.mxu0 0.0
        %613 = vmatpush.msra.mxu0 0.0
        %614 = vmatpush.msra.mxu0 0.0
        %615 = vmatpush.msra.mxu0 0.0
        %616 = vmatpush.msra.mxu0 0.0
        %617 = vmatpush.msra.mxu0 0.0
        %618 = vmatpush.msra.mxu0 0.0
        %619 = vmatpush.msra.mxu0 %v558
        %620 = vmatpush.msra.mxu0 %v557
        %621 = vmatpush.msra.mxu0 %v556
        %622 = vmatpush.msra.mxu0 %v555
        %623 = vmatmul.f32.gmra.mxu0 %v585
        %v624 = vpop.f32.mrf.mxu0
        %v625 = vadd.f32 %v576, %v624
        %626 = vdwg.mxu0
        %627 = vmatpush.msra.mxu0 0.0
        %628 = vmatpush.msra.mxu0 0.0
        %629 = vmatpush.msra.mxu0 0.0
        %630 = vmatpush.msra.mxu0 0.0
        %631 = vmatpush.msra.mxu0 0.0
        %632 = vmatpush.msra.mxu0 0.0
        %633 = vmatpush.msra.mxu0 0.0
        %634 = vmatpush.msra.mxu0 0.0
        %635 = vmatpush.msra.mxu0 0.0
        %636 = vmatpush.msra.mxu0 0.0
        %637 = vmatpush.msra.mxu0 0.0
        %638 = vmatpush.msra.mxu0 0.0
        %639 = vmatpush.msra.mxu0 %v562
        %640 = vmatpush.msra.mxu0 %v561
        %641 = vmatpush.msra.mxu0 %v560
        %642 = vmatpush.msra.mxu0 %v559
        %643 = vmatmul.f32.gmra.mxu0 %v585
        %v644 = vpop.f32.mrf.mxu0
        %v645 = vadd.f32 %v577, %v644
        %646 = vdwg.mxu0
        %647 = vmatpush.msra.mxu0 0.0
        %648 = vmatpush.msra.mxu0 0.0
        %649 = vmatpush.msra.mxu0 0.0
        %650 = vmatpush.msra.mxu0 0.0
        %651 = vmatpush.msra.mxu0 0.0
        %652 = vmatpush.msra.mxu0 0.0
        %653 = vmatpush.msra.mxu0 0.0
        %654 = vmatpush.msra.mxu0 0.0
        %655 = vmatpush.msra.mxu0 0.0
        %656 = vmatpush.msra.mxu0 0.0
        %657 = vmatpush.msra.mxu0 0.0
        %658 = vmatpush.msra.mxu0 0.0
        %659 = vmatpush.msra.mxu0 %v566
        %660 = vmatpush.msra.mxu0 %v565
        %661 = vmatpush.msra.mxu0 %v564
        %662 = vmatpush.msra.mxu0 %v563
        %663 = vmatmul.f32.gmra.mxu0 %v585
        %v664 = vpop.f32.mrf.mxu0
        %v665 = vadd.f32 %v578, %v664
        %666 = vdwg.mxu0
        %v667 = vld [vmem:[%s6] sm:$0xff]
        %v668 = vld [vmem:[%s6 + $0x8] sm:$0xff]
        %v669 = vld [vmem:[%s6 + $0x10] sm:$0xff]
        %v670 = vld [vmem:[%s6 + $0x18] sm:$0xff]
        %v671 = vld [vmem:[%s6 + $0x20] sm:$0xff]
        %v672 = vld [vmem:[%s6 + $0x28] sm:$0xff]
        %v673 = vld [vmem:[%s6 + $0x30] sm:$0xff]
        %v674 = vld [vmem:[%s6 + $0x38] sm:$0xff]
        %v675 = vld [vmem:[%s6 + $0x40] sm:$0xff]
        %v676 = vld [vmem:[%s6 + $0x48] sm:$0xff]
        %v677 = vld [vmem:[%s6 + $0x50] sm:$0xff]
        %v678 = vld [vmem:[%s6 + $0x58] sm:$0xff]
        %v679 = vld [vmem:[%s6 + $0x60] sm:$0xff]
        %v680 = vld [vmem:[%s6 + $0x68] sm:$0xff]
        %v681 = vld [vmem:[%s6 + $0x70] sm:$0xff]
        %v682 = vld [vmem:[%s6 + $0x78] sm:$0xff]
        %v683 = vld [vmem:[%s7] sm:$0x1]
        %v684 = vld [vmem:[%s7 + $0x1] sm:$0x1]
        %v685 = vld [vmem:[%s7 + $0x2] sm:$0x1]
        %v686 = vld [vmem:[%s7 + $0x3] sm:$0x1]
        %v691 = vperm.slane %v683, 0
        %v692 = vperm.slane %v684, 0
        %v693 = vperm.slane %v685, 0
        %v694 = vperm.slane %v686, 0
        %v700 = vsel %vm583, %v549, 0
        %702 = vmatpush.msra.mxu0 0.0
        %703 = vmatpush.msra.mxu0 0.0
        %704 = vmatpush.msra.mxu0 0.0
        %705 = vmatpush.msra.mxu0 0.0
        %706 = vmatpush.msra.mxu0 0.0
        %707 = vmatpush.msra.mxu0 0.0
        %708 = vmatpush.msra.mxu0 0.0
        %709 = vmatpush.msra.mxu0 0.0
        %710 = vmatpush.msra.mxu0 0.0
        %711 = vmatpush.msra.mxu0 0.0
        %712 = vmatpush.msra.mxu0 0.0
        %713 = vmatpush.msra.mxu0 0.0
        %714 = vmatpush.msra.mxu0 %v670
        %715 = vmatpush.msra.mxu0 %v669
        %716 = vmatpush.msra.mxu0 %v668
        %717 = vmatpush.msra.mxu0 %v667
        %718 = vmatmul.f32.gmra.mxu0 %v700
        %v719 = vpop.f32.mrf.mxu0
        %v720 = vadd.f32 %v691, %v719
        %721 = vdwg.mxu0
        %722 = vmatpush.msra.mxu0 0.0
        %723 = vmatpush.msra.mxu0 0.0
        %724 = vmatpush.msra.mxu0 0.0
        %725 = vmatpush.msra.mxu0 0.0
        %726 = vmatpush.msra.mxu0 0.0
        %727 = vmatpush.msra.mxu0 0.0
        %728 = vmatpush.msra.mxu0 0.0
        %729 = vmatpush.msra.mxu0 0.0
        %730 = vmatpush.msra.mxu0 0.0
        %731 = vmatpush.msra.mxu0 0.0
        %732 = vmatpush.msra.mxu0 0.0
        %733 = vmatpush.msra.mxu0 0.0
        %734 = vmatpush.msra.mxu0 %v674
        %735 = vmatpush.msra.mxu0 %v673
        %736 = vmatpush.msra.mxu0 %v672
        %737 = vmatpush.msra.mxu0 %v671
        %738 = vmatmul.f32.gmra.mxu0 %v700
        %v739 = vpop.f32.mrf.mxu0
        %v740 = vadd.f32 %v692, %v739
        %741 = vdwg.mxu0
        %742 = vmatpush.msra.mxu0 0.0
        %743 = vmatpush.msra.mxu0 0.0
        %744 = vmatpush.msra.mxu0 0.0
        %745 = vmatpush.msra.mxu0 0.0
        %746 = vmatpush.msra.mxu0 0.0
        %747 = vmatpush.msra.mxu0 0.0
        %748 = vmatpush.msra.mxu0 0.0
        %749 = vmatpush.msra.mxu0 0.0
        %750 = vmatpush.msra.mxu0 0.0
        %751 = vmatpush.msra.mxu0 0.0
        %752 = vmatpush.msra.mxu0 0.0
        %753 = vmatpush.msra.mxu0 0.0
        %754 = vmatpush.msra.mxu0 %v678
        %755 = vmatpush.msra.mxu0 %v677
        %756 = vmatpush.msra.mxu0 %v676
        %757 = vmatpush.msra.mxu0 %v675
        %758 = vmatmul.f32.gmra.mxu0 %v700
        %v759 = vpop.f32.mrf.mxu0
        %v760 = vadd.f32 %v693, %v759
        %761 = vdwg.mxu0
        %762 = vmatpush.msra.mxu0 0.0
        %763 = vmatpush.msra.mxu0 0.0
        %764 = vmatpush.msra.mxu0 0.0
        %765 = vmatpush.msra.mxu0 0.0
        %766 = vmatpush.msra.mxu0 0.0
        %767 = vmatpush.msra.mxu0 0.0
        %768 = vmatpush.msra.mxu0 0.0
        %769 = vmatpush.msra.mxu0 0.0
        %770 = vmatpush.msra.mxu0 0.0
        %771 = vmatpush.msra.mxu0 0.0
        %772 = vmatpush.msra.mxu0 0.0
        %773 = vmatpush.msra.mxu0 0.0
        %774 = vmatpush.msra.mxu0 %v682
        %775 = vmatpush.msra.mxu0 %v681
        %776 = vmatpush.msra.mxu0 %v680
        %777 = vmatpush.msra.mxu0 %v679
        %778 = vmatmul.f32.gmra.mxu0 %v700
        %v779 = vpop.f32.mrf.mxu0
        %v780 = vadd.f32 %v694, %v779
        %781 = vdwg.mxu0
        %v782 = vld [vmem:[%s8] sm:$0xff]
        %v783 = vld [vmem:[%s8 + $0x8] sm:$0xff]
        %v784 = vld [vmem:[%s8 + $0x10] sm:$0xff]
        %v785 = vld [vmem:[%s8 + $0x18] sm:$0xff]
        %v786 = vld [vmem:[%s8 + $0x20] sm:$0xff]
        %v787 = vld [vmem:[%s8 + $0x28] sm:$0xff]
        %v788 = vld [vmem:[%s8 + $0x30] sm:$0xff]
        %v789 = vld [vmem:[%s8 + $0x38] sm:$0xff]
        %v790 = vld [vmem:[%s8 + $0x40] sm:$0xff]
        %v791 = vld [vmem:[%s8 + $0x48] sm:$0xff]
        %v792 = vld [vmem:[%s8 + $0x50] sm:$0xff]
        %v793 = vld [vmem:[%s8 + $0x58] sm:$0xff]
        %v794 = vld [vmem:[%s8 + $0x60] sm:$0xff]
        %v795 = vld [vmem:[%s8 + $0x68] sm:$0xff]
        %v796 = vld [vmem:[%s8 + $0x70] sm:$0xff]
        %v797 = vld [vmem:[%s8 + $0x78] sm:$0xff]
        %v798 = vld [vmem:[%s9] sm:$0x1]
        %v799 = vld [vmem:[%s9 + $0x1] sm:$0x1]
        %v800 = vld [vmem:[%s9 + $0x2] sm:$0x1]
        %v801 = vld [vmem:[%s9 + $0x3] sm:$0x1]
        %v806 = vperm.slane %v798, 0
        %v807 = vperm.slane %v799, 0
        %v808 = vperm.slane %v800, 0
        %v809 = vperm.slane %v801, 0
        %v815 = vsel %vm583, %v550, 0
        %817 = vmatpush.msra.mxu0 0.0
        %818 = vmatpush.msra.mxu0 0.0
        %819 = vmatpush.msra.mxu0 0.0
        %820 = vmatpush.msra.mxu0 0.0
        %821 = vmatpush.msra.mxu0 0.0
        %822 = vmatpush.msra.mxu0 0.0
        %823 = vmatpush.msra.mxu0 0.0
        %824 = vmatpush.msra.mxu0 0.0
        %825 = vmatpush.msra.mxu0 0.0
        %826 = vmatpush.msra.mxu0 0.0
        %827 = vmatpush.msra.mxu0 0.0
        %828 = vmatpush.msra.mxu0 0.0
        %829 = vmatpush.msra.mxu0 %v785
        %830 = vmatpush.msra.mxu0 %v784
        %831 = vmatpush.msra.mxu0 %v783
        %832 = vmatpush.msra.mxu0 %v782
        %833 = vmatmul.f32.gmra.mxu0 %v815
        %v834 = vpop.f32.mrf.mxu0
        %v835 = vadd.f32 %v806, %v834
        %836 = vdwg.mxu0
        %837 = vmatpush.msra.mxu0 0.0
        %838 = vmatpush.msra.mxu0 0.0
        %839 = vmatpush.msra.mxu0 0.0
        %840 = vmatpush.msra.mxu0 0.0
        %841 = vmatpush.msra.mxu0 0.0
        %842 = vmatpush.msra.mxu0 0.0
        %843 = vmatpush.msra.mxu0 0.0
        %844 = vmatpush.msra.mxu0 0.0
        %845 = vmatpush.msra.mxu0 0.0
        %846 = vmatpush.msra.mxu0 0.0
        %847 = vmatpush.msra.mxu0 0.0
        %848 = vmatpush.msra.mxu0 0.0
        %849 = vmatpush.msra.mxu0 %v789
        %850 = vmatpush.msra.mxu0 %v788
        %851 = vmatpush.msra.mxu0 %v787
        %852 = vmatpush.msra.mxu0 %v786
        %853 = vmatmul.f32.gmra.mxu0 %v815
        %v854 = vpop.f32.mrf.mxu0
        %v855 = vadd.f32 %v807, %v854
        %856 = vdwg.mxu0
        %857 = vmatpush.msra.mxu0 0.0
        %858 = vmatpush.msra.mxu0 0.0
        %859 = vmatpush.msra.mxu0 0.0
        %860 = vmatpush.msra.mxu0 0.0
        %861 = vmatpush.msra.mxu0 0.0
        %862 = vmatpush.msra.mxu0 0.0
        %863 = vmatpush.msra.mxu0 0.0
        %864 = vmatpush.msra.mxu0 0.0
        %865 = vmatpush.msra.mxu0 0.0
        %866 = vmatpush.msra.mxu0 0.0
        %867 = vmatpush.msra.mxu0 0.0
        %868 = vmatpush.msra.mxu0 0.0
        %869 = vmatpush.msra.mxu0 %v793
        %870 = vmatpush.msra.mxu0 %v792
        %871 = vmatpush.msra.mxu0 %v791
        %872 = vmatpush.msra.mxu0 %v790
        %873 = vmatmul.f32.gmra.mxu0 %v815
        %v874 = vpop.f32.mrf.mxu0
        %v875 = vadd.f32 %v808, %v874
        %876 = vdwg.mxu0
        %877 = vmatpush.msra.mxu0 0.0
        %878 = vmatpush.msra.mxu0 0.0
        %879 = vmatpush.msra.mxu0 0.0
        %880 = vmatpush.msra.mxu0 0.0
        %881 = vmatpush.msra.mxu0 0.0
        %882 = vmatpush.msra.mxu0 0.0
        %883 = vmatpush.msra.mxu0 0.0
        %884 = vmatpush.msra.mxu0 0.0
        %885 = vmatpush.msra.mxu0 0.0
        %886 = vmatpush.msra.mxu0 0.0
        %887 = vmatpush.msra.mxu0 0.0
        %888 = vmatpush.msra.mxu0 0.0
        %889 = vmatpush.msra.mxu0 %v797
        %890 = vmatpush.msra.mxu0 %v796
        %891 = vmatpush.msra.mxu0 %v795
        %892 = vmatpush.msra.mxu0 %v794
        %893 = vmatmul.f32.gmra.mxu0 %v815
        %v894 = vpop.f32.mrf.mxu0
        %v895 = vadd.f32 %v809, %v894
        %896 = vdwg.mxu0
        %v897 = vld [vmem:[%s547] sm:$0xff]
        %vm898 = vcmp.ne.f32.partialorder %v897, 0.0
        %v899 = vsel %vm898, -1e+30, 0.0
        %vm900 = vcmask 64512
        %v902 = vsel %vm900, %v605, 0
        %v905 = vsel %vm900, %v720, 0
        %907 = vmatpush.xpose.msra.mxu0 0.0
        %908 = vmatpush.xpose.msra.mxu0 0.0
        %909 = vmatpush.xpose.msra.mxu0 0.0
        %910 = vmatpush.xpose.msra.mxu0 0.0
        %911 = vmatpush.xpose.msra.mxu0 0.0
        %912 = vmatpush.xpose.msra.mxu0 0.0
        %913 = vmatpush.xpose.msra.mxu0 0.0
        %914 = vmatpush.xpose.msra.mxu0 0.0
        %915 = vmatpush.xpose.msra.mxu0 0.0
        %916 = vmatpush.xpose.msra.mxu0 0.0
        %917 = vmatpush.xpose.msra.mxu0 0.0
        %918 = vmatpush.xpose.msra.mxu0 0.0
        %919 = vmatpush.xpose.msra.mxu0 0.0
        %920 = vmatpush.xpose.msra.mxu0 0.0
        %921 = vmatpush.xpose.msra.mxu0 0.0
        %922 = vmatpush.xpose.msra.mxu0 %v905
        %923 = vmatmul.f32.gmra.mxu0 %v902
        %v924 = vpop.f32.mrf.mxu0
        %v925 = vadd.f32 %v899, %v924
        %926 = vdwg.mxu0
        %v928 = vsel %vm900, %v625, 0
        %v931 = vsel %vm900, %v740, 0
        %933 = vmatpush.xpose.msra.mxu0 0.0
        %934 = vmatpush.xpose.msra.mxu0 0.0
        %935 = vmatpush.xpose.msra.mxu0 0.0
        %936 = vmatpush.xpose.msra.mxu0 0.0
        %937 = vmatpush.xpose.msra.mxu0 0.0
        %938 = vmatpush.xpose.msra.mxu0 0.0
        %939 = vmatpush.xpose.msra.mxu0 0.0
        %940 = vmatpush.xpose.msra.mxu0 0.0
        %941 = vmatpush.xpose.msra.mxu0 0.0
        %942 = vmatpush.xpose.msra.mxu0 0.0
        %943 = vmatpush.xpose.msra.mxu0 0.0
        %944 = vmatpush.xpose.msra.mxu0 0.0
        %945 = vmatpush.xpose.msra.mxu0 0.0
        %946 = vmatpush.xpose.msra.mxu0 0.0
        %947 = vmatpush.xpose.msra.mxu0 0.0
        %948 = vmatpush.xpose.msra.mxu0 %v931
        %949 = vmatmul.f32.gmra.mxu0 %v928
        %v950 = vpop.f32.mrf.mxu0
        %v951 = vadd.f32 %v899, %v950
        %952 = vdwg.mxu0
        %v954 = vsel %vm900, %v645, 0
        %v957 = vsel %vm900, %v760, 0
        %959 = vmatpush.xpose.msra.mxu0 0.0
        %960 = vmatpush.xpose.msra.mxu0 0.0
        %961 = vmatpush.xpose.msra.mxu0 0.0
        %962 = vmatpush.xpose.msra.mxu0 0.0
        %963 = vmatpush.xpose.msra.mxu0 0.0
        %964 = vmatpush.xpose.msra.mxu0 0.0
        %965 = vmatpush.xpose.msra.mxu0 0.0
        %966 = vmatpush.xpose.msra.mxu0 0.0
        %967 = vmatpush.xpose.msra.mxu0 0.0
        %968 = vmatpush.xpose.msra.mxu0 0.0
        %969 = vmatpush.xpose.msra.mxu0 0.0
        %970 = vmatpush.xpose.msra.mxu0 0.0
        %971 = vmatpush.xpose.msra.mxu0 0.0
        %972 = vmatpush.xpose.msra.mxu0 0.0
        %973 = vmatpush.xpose.msra.mxu0 0.0
        %974 = vmatpush.xpose.msra.mxu0 %v957
        %975 = vmatmul.f32.gmra.mxu0 %v954
        %v976 = vpop.f32.mrf.mxu0
        %v977 = vadd.f32 %v899, %v976
        %978 = vdwg.mxu0
        %v980 = vsel %vm900, %v665, 0
        %v983 = vsel %vm900, %v780, 0
        %985 = vmatpush.xpose.msra.mxu0 0.0
        %986 = vmatpush.xpose.msra.mxu0 0.0
        %987 = vmatpush.xpose.msra.mxu0 0.0
        %988 = vmatpush.xpose.msra.mxu0 0.0
        %989 = vmatpush.xpose.msra.mxu0 0.0
        %990 = vmatpush.xpose.msra.mxu0 0.0
        %991 = vmatpush.xpose.msra.mxu0 0.0
        %992 = vmatpush.xpose.msra.mxu0 0.0
        %993 = vmatpush.xpose.msra.mxu0 0.0
        %994 = vmatpush.xpose.msra.mxu0 0.0
        %995 = vmatpush.xpose.msra.mxu0 0.0
        %996 = vmatpush.xpose.msra.mxu0 0.0
        %997 = vmatpush.xpose.msra.mxu0 0.0
        %998 = vmatpush.xpose.msra.mxu0 0.0
        %999 = vmatpush.xpose.msra.mxu0 0.0
        %1000 = vmatpush.xpose.msra.mxu0 %v983
        %1001 = vmatmul.f32.gmra.mxu0 %v980
        %v1002 = vpop.f32.mrf.mxu0
        %v1003 = vadd.f32 %v899, %v1002
        %1004 = vdwg.mxu0
        %v1005 = vsel %vm900, %v925, -inf
        %1006 = vmax.xlane.f32.xlu0 %v1005
        %v1007 = vpop.xlane.xlu0 %1006
        %v1008 = vsel %vm900, %v951, -inf
        %1009 = vmax.xlane.f32.xlu0 %v1008
        %v1010 = vpop.xlane.xlu0 %1009
        %v1011 = vsel %vm900, %v977, -inf
        %1012 = vmax.xlane.f32.xlu0 %v1011
        %v1013 = vpop.xlane.xlu0 %1012
        %v1014 = vsel %vm900, %v1003, -inf
        %1015 = vmax.xlane.f32.xlu0 %v1014
        %v1016 = vpop.xlane.xlu0 %1015
        %v1017 = vsub.f32 %v925, %v1007
        %v1018 = vsub.f32 %v951, %v1010
        %v1019 = vsub.f32 %v977, %v1013
        %v1020 = vsub.f32 %v1003, %v1016
        %v1021 = vmul.f32 %v1017, 1.442695
        %v1022 = vpow.pop %v1021
        %v1023 = vmul.f32 %v1018, 1.442695
        %v1024 = vpow.pop %v1023
        %v1025 = vmul.f32 %v1019, 1.442695
        %v1026 = vpow.pop %v1025
        %v1027 = vmul.f32 %v1020, 1.442695
        %v1028 = vpow.pop %v1027
        %v1029 = vsel %vm900, %v1022, 0.0
        %1030 = vadd.xlane.f32.xlu0 %v1029
        %v1031 = vpop.xlane.xlu0 %1030
        %v1032 = vsel %vm900, %v1024, 0.0
        %1033 = vadd.xlane.f32.xlu0 %v1032
        %v1034 = vpop.xlane.xlu0 %1033
        %v1035 = vsel %vm900, %v1026, 0.0
        %1036 = vadd.xlane.f32.xlu0 %v1035
        %v1037 = vpop.xlane.xlu0 %1036
        %v1038 = vsel %vm900, %v1028, 0.0
        %1039 = vadd.xlane.f32.xlu0 %v1038
        %v1040 = vpop.xlane.xlu0 %1039
        %v1041 = vrcp.pop %v1031
        %v1042 = vmul.f32 %v1031, %v1041
        %v1043 = vsub.f32 1.0, %v1042
        %v1044 = vmul.f32 %v1041, %v1043
        %v1045 = vadd.f32 %v1041, %v1044
        %vm1046 = vweird.f32 %v1031
        %vm1047 = vweird.f32 %v1041
        %vm1048 = vmor %vm1046, %vm1047
        %v1049 = vsel %vm1048, %v1041, %v1045
        %v1050 = vand.u32 2147483647, %v1031
        %vm1051 = vcmp.eq.f32.partialorder %v1050, 8.507059e+37
        %v1052 = vand.u32 %v1031, 2147483648
        %v1053 = vor.u32 1.1754944e-38, %v1052
        %v1054 = vsel %vm1051, %v1053, %v1049
        %v1055 = vmul.f32 %v1022, %v1054
        %v1056 = vrcp.pop %v1034
        %v1057 = vmul.f32 %v1034, %v1056
        %v1058 = vsub.f32 1.0, %v1057
        %v1059 = vmul.f32 %v1056, %v1058
        %v1060 = vadd.f32 %v1056, %v1059
        %vm1061 = vweird.f32 %v1034
        %vm1062 = vweird.f32 %v1056
        %vm1063 = vmor %vm1061, %vm1062
        %v1064 = vsel %vm1063, %v1056, %v1060
        %v1065 = vand.u32 2147483647, %v1034
        %vm1066 = vcmp.eq.f32.partialorder %v1065, 8.507059e+37
        %v1067 = vand.u32 %v1034, 2147483648
        %v1068 = vor.u32 1.1754944e-38, %v1067
        %v1069 = vsel %vm1066, %v1068, %v1064
        %v1070 = vmul.f32 %v1024, %v1069
        %v1071 = vrcp.pop %v1037
        %v1072 = vmul.f32 %v1037, %v1071
        %v1073 = vsub.f32 1.0, %v1072
        %v1074 = vmul.f32 %v1071, %v1073
        %v1075 = vadd.f32 %v1071, %v1074
        %vm1076 = vweird.f32 %v1037
        %vm1077 = vweird.f32 %v1071
        %vm1078 = vmor %vm1076, %vm1077
        %v1079 = vsel %vm1078, %v1071, %v1075
        %v1080 = vand.u32 2147483647, %v1037
        %vm1081 = vcmp.eq.f32.partialorder %v1080, 8.507059e+37
        %v1082 = vand.u32 %v1037, 2147483648
        %v1083 = vor.u32 1.1754944e-38, %v1082
        %v1084 = vsel %vm1081, %v1083, %v1079
        %v1085 = vmul.f32 %v1026, %v1084
        %v1086 = vrcp.pop %v1040
        %v1087 = vmul.f32 %v1040, %v1086
        %v1088 = vsub.f32 1.0, %v1087
        %v1089 = vmul.f32 %v1086, %v1088
        %v1090 = vadd.f32 %v1086, %v1089
        %vm1091 = vweird.f32 %v1040
        %vm1092 = vweird.f32 %v1086
        %vm1093 = vmor %vm1091, %vm1092
        %v1094 = vsel %vm1093, %v1086, %v1090
        %v1095 = vand.u32 2147483647, %v1040
        %vm1096 = vcmp.eq.f32.partialorder %v1095, 8.507059e+37
        %v1097 = vand.u32 %v1040, 2147483648
        %v1098 = vor.u32 1.1754944e-38, %v1097
        %v1099 = vsel %vm1096, %v1098, %v1094
        %v1100 = vmul.f32 %v1028, %v1099
        %1101 = vst.msk [vmem:[%s531] sm:$0xff] %vm900, %v1055
        %1102 = vst.msk [vmem:[%s531 + $0x8] sm:$0xff] %vm900, %v1070
        %1103 = vst.msk [vmem:[%s531 + $0x10] sm:$0xff] %vm900, %v1085
        %1104 = vst.msk [vmem:[%s531 + $0x18] sm:$0xff] %vm900, %v1100
        %v1106 = vsel %vm900, %v1055, 0
        %1108 = vmatpush.msra.mxu0 0.0
        %1109 = vmatpush.msra.mxu0 0.0
        %1110 = vmatpush.msra.mxu0 0.0
        %1111 = vmatpush.msra.mxu0 0.0
        %1112 = vmatpush.msra.mxu0 0.0
        %1113 = vmatpush.msra.mxu0 0.0
        %1114 = vmatpush.msra.mxu0 0.0
        %1115 = vmatpush.msra.mxu0 0.0
        %1116 = vmatpush.msra.mxu0 0.0
        %1117 = vmatpush.msra.mxu0 0.0
        %1118 = vmatpush.msra.mxu0 0.0
        %1119 = vmatpush.msra.mxu0 0.0
        %1120 = vmatpush.msra.mxu0 0.0
        %1121 = vmatpush.msra.mxu0 0.0
        %1122 = vmatpush.msra.mxu0 0.0
        %1123 = vmatpush.msra.mxu0 %v835
        %1124 = vmatmul.f32.gmra.mxu0 %v1106
        %v1125 = vpop.f32.mrf.mxu0
        %v1126 = vadd.f32 0.0, %v1125
        %1127 = vdwg.mxu0
        %v1129 = vsel %vm900, %v1070, 0
        %1131 = vmatpush.msra.mxu0 0.0
        %1132 = vmatpush.msra.mxu0 0.0
        %1133 = vmatpush.msra.mxu0 0.0
        %1134 = vmatpush.msra.mxu0 0.0
        %1135 = vmatpush.msra.mxu0 0.0
        %1136 = vmatpush.msra.mxu0 0.0
        %1137 = vmatpush.msra.mxu0 0.0
        %1138 = vmatpush.msra.mxu0 0.0
        %1139 = vmatpush.msra.mxu0 0.0
        %1140 = vmatpush.msra.mxu0 0.0
        %1141 = vmatpush.msra.mxu0 0.0
        %1142 = vmatpush.msra.mxu0 0.0
        %1143 = vmatpush.msra.mxu0 0.0
        %1144 = vmatpush.msra.mxu0 0.0
        %1145 = vmatpush.msra.mxu0 0.0
        %1146 = vmatpush.msra.mxu0 %v855
        %1147 = vmatmul.f32.gmra.mxu0 %v1129
        %v1148 = vpop.f32.mrf.mxu0
        %v1149 = vadd.f32 0.0, %v1148
        %1150 = vdwg.mxu0
        %v1152 = vsel %vm900, %v1085, 0
        %1154 = vmatpush.msra.mxu0 0.0
        %1155 = vmatpush.msra.mxu0 0.0
        %1156 = vmatpush.msra.mxu0 0.0
        %1157 = vmatpush.msra.mxu0 0.0
        %1158 = vmatpush.msra.mxu0 0.0
        %1159 = vmatpush.msra.mxu0 0.0
        %1160 = vmatpush.msra.mxu0 0.0
        %1161 = vmatpush.msra.mxu0 0.0
        %1162 = vmatpush.msra.mxu0 0.0
        %1163 = vmatpush.msra.mxu0 0.0
        %1164 = vmatpush.msra.mxu0 0.0
        %1165 = vmatpush.msra.mxu0 0.0
        %1166 = vmatpush.msra.mxu0 0.0
        %1167 = vmatpush.msra.mxu0 0.0
        %1168 = vmatpush.msra.mxu0 0.0
        %1169 = vmatpush.msra.mxu0 %v875
        %1170 = vmatmul.f32.gmra.mxu0 %v1152
        %v1171 = vpop.f32.mrf.mxu0
        %v1172 = vadd.f32 0.0, %v1171
        %1173 = vdwg.mxu0
        %v1175 = vsel %vm900, %v1100, 0
        %1177 = vmatpush.msra.mxu0 0.0
        %1178 = vmatpush.msra.mxu0 0.0
        %1179 = vmatpush.msra.mxu0 0.0
        %1180 = vmatpush.msra.mxu0 0.0
        %1181 = vmatpush.msra.mxu0 0.0
        %1182 = vmatpush.msra.mxu0 0.0
        %1183 = vmatpush.msra.mxu0 0.0
        %1184 = vmatpush.msra.mxu0 0.0
        %1185 = vmatpush.msra.mxu0 0.0
        %1186 = vmatpush.msra.mxu0 0.0
        %1187 = vmatpush.msra.mxu0 0.0
        %1188 = vmatpush.msra.mxu0 0.0
        %1189 = vmatpush.msra.mxu0 0.0
        %1190 = vmatpush.msra.mxu0 0.0
        %1191 = vmatpush.msra.mxu0 0.0
        %1192 = vmatpush.msra.mxu0 %v895
        %1193 = vmatmul.f32.gmra.mxu0 %v1175
        %v1194 = vpop.f32.mrf.mxu0
        %v1195 = vadd.f32 0.0, %v1194
        %1196 = vdwg.mxu0
        %v1197 = vld [vmem:[%s10] sm:$0xff]
        %v1198 = vld [vmem:[%s10 + $0x8] sm:$0xff]
        %v1199 = vld [vmem:[%s10 + $0x10] sm:$0xff]
        %v1200 = vld [vmem:[%s10 + $0x18] sm:$0xff]
        %v1202 = vsel %vm900, %v1126, 0
        %1204 = vmatpush.msra.mxu0 0.0
        %1205 = vmatpush.msra.mxu0 0.0
        %1206 = vmatpush.msra.mxu0 0.0
        %1207 = vmatpush.msra.mxu0 0.0
        %1208 = vmatpush.msra.mxu0 0.0
        %1209 = vmatpush.msra.mxu0 0.0
        %1210 = vmatpush.msra.mxu0 0.0
        %1211 = vmatpush.msra.mxu0 0.0
        %1212 = vmatpush.msra.mxu0 0.0
        %1213 = vmatpush.msra.mxu0 0.0
        %1214 = vmatpush.msra.mxu0 0.0
        %1215 = vmatpush.msra.mxu0 0.0
        %1216 = vmatpush.msra.mxu0 0.0
        %1217 = vmatpush.msra.mxu0 0.0
        %1218 = vmatpush.msra.mxu0 0.0
        %1219 = vmatpush.msra.mxu0 %v1197
        %1220 = vmatmul.f32.gmra.mxu0 %v1202
        %v1221 = vpop.f32.mrf.mxu0
        %v1222 = vadd.f32 0.0, %v1221
        %1223 = vdwg.mxu0
        %v1225 = vsel %vm900, %v1149, 0
        %1227 = vmatpush.msra.mxu0 0.0
        %1228 = vmatpush.msra.mxu0 0.0
        %1229 = vmatpush.msra.mxu0 0.0
        %1230 = vmatpush.msra.mxu0 0.0
        %1231 = vmatpush.msra.mxu0 0.0
        %1232 = vmatpush.msra.mxu0 0.0
        %1233 = vmatpush.msra.mxu0 0.0
        %1234 = vmatpush.msra.mxu0 0.0
        %1235 = vmatpush.msra.mxu0 0.0
        %1236 = vmatpush.msra.mxu0 0.0
        %1237 = vmatpush.msra.mxu0 0.0
        %1238 = vmatpush.msra.mxu0 0.0
        %1239 = vmatpush.msra.mxu0 0.0
        %1240 = vmatpush.msra.mxu0 0.0
        %1241 = vmatpush.msra.mxu0 0.0
        %1242 = vmatpush.msra.mxu0 %v1198
        %1243 = vmatmul.f32.gmra.mxu0 %v1225
        %v1244 = vpop.f32.mrf.mxu0
        %v1245 = vadd.f32 0.0, %v1244
        %1246 = vdwg.mxu0
        %v1248 = vsel %vm900, %v1172, 0
        %1250 = vmatpush.msra.mxu0 0.0
        %1251 = vmatpush.msra.mxu0 0.0
        %1252 = vmatpush.msra.mxu0 0.0
        %1253 = vmatpush.msra.mxu0 0.0
        %1254 = vmatpush.msra.mxu0 0.0
        %1255 = vmatpush.msra.mxu0 0.0
        %1256 = vmatpush.msra.mxu0 0.0
        %1257 = vmatpush.msra.mxu0 0.0
        %1258 = vmatpush.msra.mxu0 0.0
        %1259 = vmatpush.msra.mxu0 0.0
        %1260 = vmatpush.msra.mxu0 0.0
        %1261 = vmatpush.msra.mxu0 0.0
        %1262 = vmatpush.msra.mxu0 0.0
        %1263 = vmatpush.msra.mxu0 0.0
        %1264 = vmatpush.msra.mxu0 0.0
        %1265 = vmatpush.msra.mxu0 %v1199
        %1266 = vmatmul.f32.gmra.mxu0 %v1248
        %v1267 = vpop.f32.mrf.mxu0
        %v1268 = vadd.f32 0.0, %v1267
        %1269 = vdwg.mxu0
        %v1271 = vsel %vm900, %v1195, 0
        %1273 = vmatpush.msra.mxu0 0.0
        %1274 = vmatpush.msra.mxu0 0.0
        %1275 = vmatpush.msra.mxu0 0.0
        %1276 = vmatpush.msra.mxu0 0.0
        %1277 = vmatpush.msra.mxu0 0.0
        %1278 = vmatpush.msra.mxu0 0.0
        %1279 = vmatpush.msra.mxu0 0.0
        %1280 = vmatpush.msra.mxu0 0.0
        %1281 = vmatpush.msra.mxu0 0.0
        %1282 = vmatpush.msra.mxu0 0.0
        %1283 = vmatpush.msra.mxu0 0.0
        %1284 = vmatpush.msra.mxu0 0.0
        %1285 = vmatpush.msra.mxu0 0.0
        %1286 = vmatpush.msra.mxu0 0.0
        %1287 = vmatpush.msra.mxu0 0.0
        %1288 = vmatpush.msra.mxu0 %v1200
        %1289 = vmatmul.f32.gmra.mxu0 %v1271
        %v1290 = vpop.f32.mrf.mxu0
        %v1291 = vadd.f32 0.0, %v1290
        %1292 = vdwg.mxu0
        %v1293 = vsel %vm583, %v1222, 0.0
        %v1294 = vsel %vm583, %v1245, 0.0
        %v1295 = vadd.f32 %v1293, %v1294
        %v1296 = vsel %vm583, %v1268, 0.0
        %v1297 = vadd.f32 %v1295, %v1296
        %v1298 = vsel %vm583, %v1291, 0.0
        %v1299 = vadd.f32 %v1297, %v1298
        %v1300 = vld [vmem:[%s11] sm:$0x1]
        %v1302 = vperm.slane %v1300, 0
        %v1304 = vadd.f32 %v1299, %v1302
        %v1305 = vadd.f32 %v1304, %v548
        %v1306 = vsel %vm583, %v1305, 0.0
        %1307 = vadd.xlane.f32.xlu0 %v1306
        %v1308 = vpop.xlane.xlu0 %1307
        %v1309 = vrcp.pop 32.0
        %v1310 = vmul.f32 32.0, %v1309
        %v1311 = vsub.f32 1.0, %v1310
        %v1312 = vmul.f32 %v1309, %v1311
        %v1313 = vadd.f32 %v1309, %v1312
        %vm1314 = vweird.f32 %v1309
        %v1315 = vsel %vm1314, %v1309, %v1313
        %v1316 = vmul.f32 %v1308, %v1315
        %v1317 = vsub.f32 %v1305, %v1316
        %v1318 = vmul.f32 %v1317, %v1317
        %v1319 = vsel %vm583, %v1318, 0.0
        %1320 = vadd.xlane.f32.xlu0 %v1319
        %v1321 = vpop.xlane.xlu0 %1320
        %v1322 = vmul.f32 %v1321, %v1315
        %v1323 = vadd.f32 %v1322, 1e-05
        %v1324 = vrsqrt.pop %v1323
        %v1325 = vmul.f32 %v1324, %v1323
        %v1326 = vmul.f32 %v1325, %v1324
        %v1327 = vmul.f32 0.5, %v1326
        %v1328 = vsub.f32 1.5, %v1327
        %v1329 = vmul.f32 %v1324, %v1328
        %vm1330 = vweird.f32 %v1323
        %vm1331 = vweird.f32 %v1324
        %vm1332 = vmor %vm1330, %vm1331
        %v1333 = vsel %vm1332, %v1324, %v1329
        %v1334 = vmul.f32 %v1317, %v1333
        %v1335 = vld [vmem:[%s12] sm:$0x1]
        %v1337 = vperm.slane %v1335, 0
        %v1339 = vmul.f32 %v1334, %v1337
        %v1340 = vld [vmem:[%s13] sm:$0x1]
        %v1342 = vperm.slane %v1340, 0
        %v1344 = vadd.f32 %v1339, %v1342
        %1345 = vst.msk [vmem:[%s525] sm:$0xff] %vm583, %v1344
        %s1346 = sand.u32 %s352, 1
        %s1347 = scalar_lea.sflag [#allocation3], %s1346
        %s1348 = sand.u32 %s352, 1
        %s1349 = smul.addr %s1348, 8
        %s1350 = scalar_lea.vmem [#allocation2], %s1349
        %s1351 = sand.u32 %s378, 1
        %s1352 = sand.u32 %s378, 1
        %s1353 = smul.addr %s1352, 32
        %s1354 = scalar_lea.vmem [#allocation4], %s1353
        // Predicated region
        $region77: #{tpu_custom_call.1} parent=75 // pred_check
          %p1355 = pneg %p362
        $region78: #{tpu_custom_call.1} parent=75 // pred_check_branch
          %1357 = sbr.rel (%p1355) target = $region80
        $region79: #{tpu_custom_call.1} parent=75 // pred_region
          %1359 = vsyncadd %s1347, 0
          %s1360 = smul.addr %s30, 8
          %s1361 = scalar_lea.hbm %s14, %s1360
          %s1363 = sshll.u32 %s1350, 4
          %s1364 = int_to_ptr.vmem [resolvable:$true] %s1363
          %s1365 = sshll.u32 %s1361, 4
          %s1366 = int_to_ptr.hbm [resolvable:$true] %s1365
          %1368 = dma.vmem_to_hbm [thread:$0]  %s1364, 128, %s1366, %s1347
        $region80: #{tpu_custom_call.1} parent=75 // pred_fallthru
          _
        // Predicated region
        $region81: #{tpu_custom_call.1} parent=75 // pred_check
          %p1369 = pneg %p388
        $region82: #{tpu_custom_call.1} parent=75 // pred_check_branch
          %1371 = sbr.rel (%p1369) target = $region84
        $region83: #{tpu_custom_call.1} parent=75 // pred_region
          %s1372 = smul.addr %s30, 8
          %s1373 = scalar_lea.vmem %s15, %s1372
          // Predicated region
          $region85: #{tpu_custom_call.1} parent=83 // pred_check
            _
          $region86: #{tpu_custom_call.1} parent=83 // pred_check_branch
            %1375 = sbr.rel (0) target = $region88
          $region87: #{tpu_custom_call.1} parent=83 // pred_region
            // Predicated region
            $region89: #{tpu_custom_call.1} parent=87 // pred_check
              _
            $region90: #{tpu_custom_call.1} parent=87 // pred_check_branch
              %1377 = sbr.rel (0) target = $region92
            $region91: #{tpu_custom_call.1} parent=87 // pred_region
              // Predicated region
              $region104: #{tpu_custom_call.1} parent=91 // pred_check
                _
              $region105: #{tpu_custom_call.1} parent=91 // pred_check_branch
                %1399 = sbr.rel (0) target = $region107
              $region106: #{tpu_custom_call.1} parent=91 // pred_region
                loop: start=0, step=1, limit=1
                $region108: #{tpu_custom_call.1} parent=106 // loop_pre_header
                  _
                $region109: #{tpu_custom_call.1} parent=106 // loop_header
                  %s1401 = sphi 0, %s1405
                  %p1402 = scmp.ge.s32.totalorder %s1401, 1
                  %s1406 = sphi %s1354, %s1354
                  %s1407 = sphi %s1373, %s1373
                $region110: #{tpu_custom_call.1} parent=106 // loop_header_branch
                  %1404 = sbr.rel (%p1402) target = $region114
                $region111: #{tpu_custom_call.1} parent=106 // loop_body
                  %v1408 = vld [vmem:[%s1406] sm:$0xff]
                  %1409 = vst [vmem:[%s1407] sm:$0xff] %v1408
                  %v1410 = vld [vmem:[%s1406 + $0x8] sm:$0xff]
                  %1411 = vst [vmem:[%s1407 + $0x10] sm:$0xff] %v1410
                  %v1412 = vld [vmem:[%s1406 + $0x10] sm:$0xff]
                  %1413 = vst [vmem:[%s1407 + $0x20] sm:$0xff] %v1412
                  %v1414 = vld [vmem:[%s1406 + $0x18] sm:$0xff]
                  %1415 = vst [vmem:[%s1407 + $0x30] sm:$0xff] %v1414
                $region112: #{tpu_custom_call.1} parent=106 // loop_footer
                  %s1405 = sadd.s32 1, %s1401
                $region113: #{tpu_custom_call.1} parent=106 // loop_footer_branch
                  %1400 = sbr.rel target = $region109
                $region114: #{tpu_custom_call.1} parent=106 // loop_exit
                  _
              $region107: #{tpu_custom_call.1} parent=91 // pred_fallthru
                _
              // Predicated region
              $region115: #{tpu_custom_call.1} parent=91 // pred_check
                _
              $region116: #{tpu_custom_call.1} parent=91 // pred_check_branch
                %1417 = sbr.rel target = $region118
              $region117: #{tpu_custom_call.1} parent=91 // pred_region
                _
              $region118: #{tpu_custom_call.1} parent=91 // pred_fallthru
                _
            $region92: #{tpu_custom_call.1} parent=87 // pred_fallthru
              _
            // Predicated region
            $region93: #{tpu_custom_call.1} parent=87 // pred_check
              _
            $region94: #{tpu_custom_call.1} parent=87 // pred_check_branch
              %1379 = sbr.rel target = $region96
            $region95: #{tpu_custom_call.1} parent=87 // pred_region
              %s1381 = ssub.s32 256, 1
              loop: start=0, step=1, limit=1
              $region97: #{tpu_custom_call.1} parent=95 // loop_pre_header
                _
              $region98: #{tpu_custom_call.1} parent=95 // loop_header
                %s1383 = sphi 0, %s1387
                %p1384 = scmp.ge.s32.totalorder %s1383, 1
                %s1388 = sphi %s1354, %s1354
                %s1389 = sphi %s1373, %s1373
              $region99: #{tpu_custom_call.1} parent=95 // loop_header_branch
                %1386 = sbr.rel (%p1384) target = $region103
              $region100: #{tpu_custom_call.1} parent=95 // loop_body
                %v1390 = vld [vmem:[%s1388] sm:%s1381]
                %1391 = vst [vmem:[%s1389] sm:%s1381] %v1390
                %v1392 = vld [vmem:[%s1388 + $0x8] sm:%s1381]
                %1393 = vst [vmem:[%s1389 + $0x10] sm:%s1381] %v1392
                %v1394 = vld [vmem:[%s1388 + $0x10] sm:%s1381]
                %1395 = vst [vmem:[%s1389 + $0x20] sm:%s1381] %v1394
                %v1396 = vld [vmem:[%s1388 + $0x18] sm:%s1381]
                %1397 = vst [vmem:[%s1389 + $0x30] sm:%s1381] %v1396
              $region101: #{tpu_custom_call.1} parent=95 // loop_footer
                %s1387 = sadd.s32 1, %s1383
              $region102: #{tpu_custom_call.1} parent=95 // loop_footer_branch
                %1382 = sbr.rel target = $region98
              $region103: #{tpu_custom_call.1} parent=95 // loop_exit
                _
            $region96: #{tpu_custom_call.1} parent=87 // pred_fallthru
              _
          $region88: #{tpu_custom_call.1} parent=83 // pred_fallthru
            _
          %1418 = vnop
        $region84: #{tpu_custom_call.1} parent=75 // pred_fallthru
          _
      $region76: #{tpu_custom_call.1} parent=5 // pred_fallthru
        _
      %p1419 = scmp.le.s32.totalorder 2, %s25
      // Predicated region
      $region119: #{tpu_custom_call.1} parent=5 // pred_check
        %p1420 = pneg %p1419
      $region120: #{tpu_custom_call.1} parent=5 // pred_check_branch
        %1422 = sbr.rel (%p1420) target = $region122
      $region121: #{tpu_custom_call.1} parent=5 // pred_region
        %s1423 = ssub.s32 %s25, 2
        // Predicated region
        $region123: #{tpu_custom_call.1} parent=121 // pred_check
          %p1424 = pneg %p368
        $region124: #{tpu_custom_call.1} parent=121 // pred_check_branch
          %1426 = sbr.rel (%p1424) target = $region126
        $region125: #{tpu_custom_call.1} parent=121 // pred_region
          %s1427 = sand.u32 %s353, 1
          %s1428 = scalar_lea.sflag [#allocation3], %s1427
          %s1429 = sand.u32 %s353, 1
          %s1430 = smul.addr %s1429, 8
          %s1431 = scalar_lea.vmem [#allocation2], %s1430
          %1433 = dma.done %s1428, 128
        $region126: #{tpu_custom_call.1} parent=121 // pred_fallthru
          _
        // Predicated region
        $region127: #{tpu_custom_call.1} parent=121 // pred_check
          %p1434 = pneg %p394
        $region128: #{tpu_custom_call.1} parent=121 // pred_check_branch
          %1436 = sbr.rel (%p1434) target = $region130
        $region129: #{tpu_custom_call.1} parent=121 // pred_region
          %s1437 = sand.u32 %s379, 1
          %s1438 = sand.u32 %s379, 1
          %s1439 = smul.addr %s1438, 32
          %s1440 = scalar_lea.vmem [#allocation4], %s1439
        $region130: #{tpu_custom_call.1} parent=121 // pred_fallthru
          _
      $region122: #{tpu_custom_call.1} parent=5 // pred_fallthru
        _
    $region6: #{tpu_custom_call.1} parent=1 // loop_footer
      %s29 = sadd.s32 1, %s25
    $region7: #{tpu_custom_call.1} parent=1 // loop_footer_branch
      %24 = sbr.rel target = $region3
    $region8: #{tpu_custom_call.1} parent=1 // loop_exit
      _
    %1441 = vsyncpa [#allocation3], 1
    %s1442 = scalar_lea.sflag [#allocation3], 1
    %1443 = vsyncpa %s1442, 1

</llo_original>
